<compile_context>
chip_gen: v5e
topology: v5e:2x2
jax: 0.10.0
libtpu: 0.0.40
codegen_flags: <defaults>
</compile_context>

<pallas_src>
import functools

import jax
import jax.numpy as jnp
from jax.experimental import pallas as pl
from jax.experimental.pallas import tpu as pltpu


def _accumulate_conv_strip(x_ref, w_ref, acc_ref, *, K, dil, rows_out, W_out, Cin):
    """Dilated conv for one output row strip via per-tap MXU matmuls.

    x_ref:   (Hp, Wp, Cin)              padded image (bf16), resident per batch
    w_ref:   (K*K, Cin, Cout_pad)       reshaped weights (bf16), grid-resident
    acc_ref: (rows_out*W_out, Cout_pad) f32 VMEM scratch accumulator
    """
    row0 = pl.multiple_of(pl.program_id(1) * rows_out, rows_out)
    for kh in range(K):
        for kw in range(K):
            xs = x_ref[pl.ds(row0 + kh * dil, rows_out),
                       pl.ds(kw * dil, W_out), :]
            # Layout-free merge when W_out % 8 == 0 (sublane-aligned strip).
            xs = xs.reshape(rows_out * W_out, Cin)
            part = jnp.dot(xs, w_ref[kh * K + kw],
                           preferred_element_type=jnp.float32)
            if kh == 0 and kw == 0:
                acc_ref[...] = part
            else:
                acc_ref[...] += part


def stats_kernel(x_ref, w_ref, stats_ref, acc_ref, *,
                 K, dil, rows_out, W_out, Cin):
    """Pass 1: conv for this strip -> per-strip BN (sum, sumsq) only (no HBM conv)."""
    _accumulate_conv_strip(x_ref, w_ref, acc_ref, K=K, dil=dil,
                           rows_out=rows_out, W_out=W_out, Cin=Cin)
    acc = acc_ref[...]
    # NOTE: E[x^2]-E[x]^2 in f32 is adequate at these sizes; a Welford-style
    # per-strip (count, mean, M2) combine would be safer for huge N*H*W.
    stats_ref[...] = jnp.concatenate(
        [jnp.sum(acc, axis=0, keepdims=True),
         jnp.sum(acc * acc, axis=0, keepdims=True)], axis=0)


def conv_bn_kernel(x_ref, w_ref, scale_ref, shift_ref, out_ref, acc_ref, *,
                   K, dil, rows_out, W_out, Cin, Cout):
    """Pass 2: recompute conv strip, fuse BN affine + channel un-pad into the store."""
    _accumulate_conv_strip(x_ref, w_ref, acc_ref, K=K, dil=dil,
                           rows_out=rows_out, W_out=W_out, Cin=Cin)
    y = acc_ref[...] * scale_ref[0] + shift_ref[0]          # (rows*W, Cout_pad)
    out_ref[...] = y[:, :Cout].reshape(rows_out, W_out, Cout)


def _pick_row_strip(H_out, W_out, Cin, Cout_pad, itemsize=2):
    """Rows per output strip: ~4 MiB of strip-local data per step so large maps
    get many grid steps, while small maps still get >= 2 strips (pipelining and
    v7x megacore even at batch 2)."""
    budget = 4 * 1024 * 1024
    per_row = W_out * (Cout_pad * 4 + Cin * itemsize + Cout_pad * 4)
    rows = max(1, min(H_out, budget // max(per_row, 1)))
    while H_out % rows:
        rows -= 1
    if rows == H_out and H_out % 2 == 0:
        rows //= 2
    return rows


def aspp_forward(x_nchw, w_oihw, gamma, beta, *, padding, dilation,
                 eps=1e-5, compute_dtype=jnp.bfloat16):
    """ASPPModule.forward: bn(atrous_conv(x)).  Input NCHW, output NCHW."""
    N, Cin, H, W = x_nchw.shape
    Cout, _, K, _ = w_oihw.shape

    Hp, Wp = H + 2 * padding, W + 2 * padding
    H_out = Hp - dilation * (K - 1)
    W_out = Wp - dilation * (K - 1)

    # Lane-dense channel axis for all in-kernel matmul tiles.
    Cout_pad = max(128, ((Cout + 127) // 128) * 128)

    itemsize = jnp.dtype(compute_dtype).itemsize
    rows_out = _pick_row_strip(H_out, W_out, Cin, Cout_pad, itemsize)
    R = H_out // rows_out

    # --- glue: NCHW -> NHWC (+ spatial zero pad), OIHW -> (K*K, Cin, Cout_pad) ---
    x = jnp.transpose(x_nchw, (0, 2, 3, 1))
    x = jnp.pad(x, ((0, 0), (padding, padding), (padding, padding), (0, 0)))
    x = x.astype(compute_dtype)

    w = jnp.transpose(w_oihw, (2, 3, 1, 0)).reshape(K * K, Cin, Cout)
    w = jnp.pad(w.astype(compute_dtype), ((0, 0), (0, 0), (0, Cout_pad - Cout)))

    # --- specs shared by both passes ---
    x_spec = pl.BlockSpec((None, Hp, Wp, Cin), lambda n, r: (n, 0, 0, 0))
    w_spec = pl.BlockSpec((K * K, Cin, Cout_pad), lambda n, r: (0, 0, 0),
                          pipeline_mode=pl.Buffered(1))   # grid-constant

    # --- explicit VMEM budget (input 2x, weights 1x, scratch, output 2x) ---
    img_bytes = Hp * Wp * Cin * itemsize
    w_bytes = K * K * Cin * Cout_pad * itemsize
    acc_bytes = rows_out * W_out * Cout_pad * 4
    out_strip_bytes = rows_out * W_out * Cout * 4
    stats_bytes = 2 * Cout_pad * 4
    vmem_needed = (2 * img_bytes + w_bytes + acc_bytes
                   + 2 * max(out_strip_bytes, stats_bytes) + 4 * Cout_pad * 4)
    vmem_limit = int(min(max(vmem_needed * 3 // 2, 32 * 1024 * 1024),
                         100 * 1024 * 1024))

    flops = 2 * N * H_out * W_out * K * K * Cin * Cout_pad
    compiler_params = pltpu.CompilerParams(
        dimension_semantics=("parallel", "parallel"),
        vmem_limit_bytes=vmem_limit)

    # ---------------- pass 1: per-strip BN partial statistics only ----------------
    stats = pl.pallas_call(
        functools.partial(stats_kernel, K=K, dil=dilation,
                          rows_out=rows_out, W_out=W_out, Cin=Cin),
        grid=(N, R),
        in_specs=[x_spec, w_spec],
        out_specs=pl.BlockSpec((None, None, 2, Cout_pad),
                               lambda n, r: (n, r, 0, 0)),
        out_shape=jax.ShapeDtypeStruct((N, R, 2, Cout_pad), jnp.float32),
        scratch_shapes=[pltpu.VMEM((rows_out * W_out, Cout_pad), jnp.float32)],
        compiler_params=compiler_params,
        cost_estimate=pl.CostEstimate(
            flops=flops, transcendentals=0,
            bytes_accessed=int(x.size * itemsize + w.size * itemsize
                               + N * R * 2 * Cout_pad * 4)),
    )(x, w)

    # -------- global BN statistics across all strips (tiny, plain JAX) --------
    count = float(N * H_out * W_out)
    total = jnp.sum(stats, axis=(0, 1))                    # (2, Cout_pad)
    mean = total[0] / count
    var = jnp.maximum(total[1] / count - mean * mean, 0.0)  # biased batch var

    gamma_p = jnp.pad(gamma.astype(jnp.float32), (0, Cout_pad - Cout))
    beta_p = jnp.pad(beta.astype(jnp.float32), (0, Cout_pad - Cout))
    scale = gamma_p * jax.lax.rsqrt(var + eps)               # (Cout_pad,)
    shift = beta_p - mean * scale                            # (Cout_pad,)

    # -------- pass 2: recompute conv + fused BN affine + channel un-pad --------
    out_nhwc = pl.pallas_call(
        functools.partial(conv_bn_kernel, K=K, dil=dilation, rows_out=rows_out,
                          W_out=W_out, Cin=Cin, Cout=Cout),
        grid=(N, R),
        in_specs=[
            x_spec, w_spec,
            pl.BlockSpec((1, Cout_pad), lambda n, r: (0, 0),
                         pipeline_mode=pl.Buffered(1)),
            pl.BlockSpec((1, Cout_pad), lambda n, r: (0, 0),
                         pipeline_mode=pl.Buffered(1)),
        ],
        out_specs=pl.BlockSpec((None, rows_out, W_out, Cout),
                               lambda n, r: (n, r, 0, 0)),
        out_shape=jax.ShapeDtypeStruct((N, H_out, W_out, Cout), jnp.float32),
        scratch_shapes=[pltpu.VMEM((rows_out * W_out, Cout_pad), jnp.float32)],
        compiler_params=compiler_params,
        cost_estimate=pl.CostEstimate(
            flops=flops, transcendentals=0,
            bytes_accessed=int(x.size * itemsize + w.size * itemsize
                               + N * H_out * W_out * Cout * 4)),
    )(x, w, scale.reshape(1, Cout_pad), shift.reshape(1, Cout_pad))

    # NHWC (already un-padded to Cout) -> NCHW.
    return jnp.transpose(out_nhwc, (0, 3, 1, 2))


if __name__ == "__main__":
    # ASPPModule(inplanes=4, planes=8, kernel_size=3, padding=2, dilation=2)
    inplanes, planes, kernel_size, padding, dilation = 4, 8, 3, 2, 2
    N, H, W = 2, 16, 16

    key = jax.random.PRNGKey(0)
    kx, kw = jax.random.split(key)

    x = jax.random.normal(kx, (N, inplanes, H, W), dtype=jnp.float32)

    # kaiming_normal_: std = sqrt(2 / fan_in), fan_in = Cin*K*K.
    fan_in = inplanes * kernel_size * kernel_size
    w_oihw = jax.random.normal(
        kw, (planes, inplanes, kernel_size, kernel_size),
        dtype=jnp.float32) * jnp.sqrt(2.0 / fan_in)
    # BatchNorm2d init: weight = 1, bias = 0.
    gamma = jnp.ones((planes,), jnp.float32)
    beta = jnp.zeros((planes,), jnp.float32)

    out = aspp_forward(x, w_oihw, gamma, beta,
                       padding=padding, dilation=dilation)
    out = jax.block_until_ready(out)

    # Pure-JAX reference.  The kernel feeds the MXU bf16 operands with f32
    # accumulation, so round the reference inputs to bf16 as well to isolate
    # kernel correctness from the (intentional) bf16 input quantization.
    xq = x.astype(jnp.bfloat16).astype(jnp.float32)
    wq = w_oihw.astype(jnp.bfloat16).astype(jnp.float32)
    ref_conv = jax.lax.conv_general_dilated(
        xq, wq, window_strides=(1, 1),
        padding=[(padding, padding), (padding, padding)],
        rhs_dilation=(dilation, dilation),
        dimension_numbers=('NCHW', 'OIHW', 'NCHW'),
        preferred_element_type=jnp.float32)
    m = ref_conv.mean(axis=(0, 2, 3), keepdims=True)
    v = ((ref_conv - m) ** 2).mean(axis=(0, 2, 3), keepdims=True)
    ref = (ref_conv - m) * jax.lax.rsqrt(v + 1e-5) \
        * gamma[None, :, None, None] + beta[None, :, None, None]

    assert out.shape == (N, planes, H, W), out.shape
    assert jnp.allclose(out, ref, atol=2e-3, rtol=2e-3), \
        float(jnp.max(jnp.abs(out - ref)))

    print("KERNEL_OK")
</pallas_src>

<mosaic_0001>
module attributes {stable_mosaic.version = 11 : i64} {
  func.func @stats_kernel(%arg0: i32, %arg1: i32, %arg2: memref<1x20x20x4xbf16, #tpu.memory_space<vmem>>, %arg3: memref<9x4x128xbf16, #tpu.memory_space<vmem>>, %arg4: memref<1x1x2x128xf32, #tpu.memory_space<vmem>>, %arg5: memref<128x128xf32, #tpu.memory_space<vmem>>) attributes {dimension_semantics = [#tpu.dimension_semantics<parallel>, #tpu.dimension_semantics<parallel>], iteration_bounds = array<i64: 2, 2>, scalar_prefetch = 0 : i64, scratch_operands = 1 : i64, tpu.core_type = #tpu.core_type<tc>, window_params = [{transform_indices = @transform_0, window_bounds = array<i64: 1, 20, 20, 4>}, {pipeline_mode = #tpu.pipeline_mode<synchronous>, transform_indices = @transform_1, window_bounds = array<i64: 9, 4, 128>}, {transform_indices = @transform_2, window_bounds = array<i64: 1, 1, 2, 128>}]} {
    %c8_i32 = arith.constant 8 : i32
    %0 = arith.muli %arg1, %c8_i32 : i32
    %1 = tpu.assume_multiple %0, 8 : i32
    %c0_i32 = arith.constant 0 : i32
    %2 = arith.addi %1, %c0_i32 : i32
    %c0 = arith.constant 0 : index
    %3 = arith.index_cast %2 : i32 to index
    %c0_0 = arith.constant 0 : index
    %c0_1 = arith.constant 0 : index
    %4 = vector.load %arg2[%c0, %3, %c0_0, %c0_1] : memref<1x20x20x4xbf16, #tpu.memory_space<vmem>>, vector<1x8x16x4xbf16>
    %5 = vector.shape_cast %4 : vector<1x8x16x4xbf16> to vector<8x16x4xbf16>
    %6 = vector.shape_cast %5 : vector<8x16x4xbf16> to vector<128x4xbf16>
    %c0_2 = arith.constant 0 : index
    %c0_3 = arith.constant 0 : index
    %c0_4 = arith.constant 0 : index
    %7 = vector.load %arg3[%c0_2, %c0_3, %c0_4] : memref<9x4x128xbf16, #tpu.memory_space<vmem>>, vector<1x4x128xbf16>
    %8 = vector.shape_cast %7 : vector<1x4x128xbf16> to vector<4x128xbf16>
    %cst = arith.constant dense<0.000000e+00> : vector<128x128xf32>
    %9 = tpu.matmul %6, %8, %cst {dimension_numbers = #tpu.dot_dimension_numbers<[1], [0], [0], [1], [0, 0, 1, 1], [], []>} : vector<128x4xbf16>, vector<4x128xbf16>, vector<128x128xf32> -> vector<128x128xf32>
    %c0_5 = arith.constant 0 : index
    %c0_6 = arith.constant 0 : index
    %10 = vector.load %arg5[%c0_5, %c0_6] : memref<128x128xf32, #tpu.memory_space<vmem>>, vector<128x128xf32>
    tpu.vector_store %arg5[%c0_5, %c0_6], %9 {strides = array<i32>} : memref<128x128xf32, #tpu.memory_space<vmem>>, vector<128x128xf32>,
    %c0_i32_7 = arith.constant 0 : i32
    %11 = arith.addi %1, %c0_i32_7 : i32
    %c0_8 = arith.constant 0 : index
    %12 = arith.index_cast %11 : i32 to index
    %c2 = arith.constant 2 : index
    %c0_9 = arith.constant 0 : index
    %13 = vector.load %arg2[%c0_8, %12, %c2, %c0_9] : memref<1x20x20x4xbf16, #tpu.memory_space<vmem>>, vector<1x8x16x4xbf16>
    %14 = vector.shape_cast %13 : vector<1x8x16x4xbf16> to vector<8x16x4xbf16>
    %15 = vector.shape_cast %14 : vector<8x16x4xbf16> to vector<128x4xbf16>
    %c1 = arith.constant 1 : index
    %c0_10 = arith.constant 0 : index
    %c0_11 = arith.constant 0 : index
    %16 = vector.load %arg3[%c1, %c0_10, %c0_11] : memref<9x4x128xbf16, #tpu.memory_space<vmem>>, vector<1x4x128xbf16>
    %17 = vector.shape_cast %16 : vector<1x4x128xbf16> to vector<4x128xbf16>
    %cst_12 = arith.constant dense<0.000000e+00> : vector<128x128xf32>
    %18 = tpu.matmul %15, %17, %cst_12 {dimension_numbers = #tpu.dot_dimension_numbers<[1], [0], [0], [1], [0, 0, 1, 1], [], []>} : vector<128x4xbf16>, vector<4x128xbf16>, vector<128x128xf32> -> vector<128x128xf32>
    %c0_13 = arith.constant 0 : index
    %c0_14 = arith.constant 0 : index
    %19 = vector.load %arg5[%c0_13, %c0_14] : memref<128x128xf32, #tpu.memory_space<vmem>>, vector<128x128xf32>
    %20 = arith.addf %19, %18 : vector<128x128xf32>
    %c0_15 = arith.constant 0 : index
    %c0_16 = arith.constant 0 : index
    %21 = vector.load %arg5[%c0_15, %c0_16] : memref<128x128xf32, #tpu.memory_space<vmem>>, vector<128x128xf32>
    tpu.vector_store %arg5[%c0_15, %c0_16], %20 {strides = array<i32>} : memref<128x128xf32, #tpu.memory_space<vmem>>, vector<128x128xf32>,
    %c0_i32_17 = arith.constant 0 : i32
    %22 = arith.addi %1, %c0_i32_17 : i32
    %c0_18 = arith.constant 0 : index
    %23 = arith.index_cast %22 : i32 to index
    %c4 = arith.constant 4 : index
    %c0_19 = arith.constant 0 : index
    %24 = vector.load %arg2[%c0_18, %23, %c4, %c0_19] : memref<1x20x20x4xbf16, #tpu.memory_space<vmem>>, vector<1x8x16x4xbf16>
    %25 = vector.shape_cast %24 : vector<1x8x16x4xbf16> to vector<8x16x4xbf16>
    %26 = vector.shape_cast %25 : vector<8x16x4xbf16> to vector<128x4xbf16>
    %c2_20 = arith.constant 2 : index
    %c0_21 = arith.constant 0 : index
    %c0_22 = arith.constant 0 : index
    %27 = vector.load %arg3[%c2_20, %c0_21, %c0_22] : memref<9x4x128xbf16, #tpu.memory_space<vmem>>, vector<1x4x128xbf16>
    %28 = vector.shape_cast %27 : vector<1x4x128xbf16> to vector<4x128xbf16>
    %cst_23 = arith.constant dense<0.000000e+00> : vector<128x128xf32>
    %29 = tpu.matmul %26, %28, %cst_23 {dimension_numbers = #tpu.dot_dimension_numbers<[1], [0], [0], [1], [0, 0, 1, 1], [], []>} : vector<128x4xbf16>, vector<4x128xbf16>, vector<128x128xf32> -> vector<128x128xf32>
    %c0_24 = arith.constant 0 : index
    %c0_25 = arith.constant 0 : index
    %30 = vector.load %arg5[%c0_24, %c0_25] : memref<128x128xf32, #tpu.memory_space<vmem>>, vector<128x128xf32>
    %31 = arith.addf %30, %29 : vector<128x128xf32>
    %c0_26 = arith.constant 0 : index
    %c0_27 = arith.constant 0 : index
    %32 = vector.load %arg5[%c0_26, %c0_27] : memref<128x128xf32, #tpu.memory_space<vmem>>, vector<128x128xf32>
    tpu.vector_store %arg5[%c0_26, %c0_27], %31 {strides = array<i32>} : memref<128x128xf32, #tpu.memory_space<vmem>>, vector<128x128xf32>,
    %c2_i32 = arith.constant 2 : i32
    %33 = arith.addi %1, %c2_i32 : i32
    %c0_28 = arith.constant 0 : index
    %34 = arith.index_cast %33 : i32 to index
    %c0_29 = arith.constant 0 : index
    %c0_30 = arith.constant 0 : index
    %35 = vector.load %arg2[%c0_28, %34, %c0_29, %c0_30] : memref<1x20x20x4xbf16, #tpu.memory_space<vmem>>, vector<1x8x16x4xbf16>
    %36 = vector.shape_cast %35 : vector<1x8x16x4xbf16> to vector<8x16x4xbf16>
    %37 = vector.shape_cast %36 : vector<8x16x4xbf16> to vector<128x4xbf16>
    %c3 = arith.constant 3 : index
    %c0_31 = arith.constant 0 : index
    %c0_32 = arith.constant 0 : index
    %38 = vector.load %arg3[%c3, %c0_31, %c0_32] : memref<9x4x128xbf16, #tpu.memory_space<vmem>>, vector<1x4x128xbf16>
    %39 = vector.shape_cast %38 : vector<1x4x128xbf16> to vector<4x128xbf16>
    %cst_33 = arith.constant dense<0.000000e+00> : vector<128x128xf32>
    %40 = tpu.matmul %37, %39, %cst_33 {dimension_numbers = #tpu.dot_dimension_numbers<[1], [0], [0], [1], [0, 0, 1, 1], [], []>} : vector<128x4xbf16>, vector<4x128xbf16>, vector<128x128xf32> -> vector<128x128xf32>
    %c0_34 = arith.constant 0 : index
    %c0_35 = arith.constant 0 : index
    %41 = vector.load %arg5[%c0_34, %c0_35] : memref<128x128xf32, #tpu.memory_space<vmem>>, vector<128x128xf32>
    %42 = arith.addf %41, %40 : vector<128x128xf32>
    %c0_36 = arith.constant 0 : index
    %c0_37 = arith.constant 0 : index
    %43 = vector.load %arg5[%c0_36, %c0_37] : memref<128x128xf32, #tpu.memory_space<vmem>>, vector<128x128xf32>
    tpu.vector_store %arg5[%c0_36, %c0_37], %42 {strides = array<i32>} : memref<128x128xf32, #tpu.memory_space<vmem>>, vector<128x128xf32>,
    %c2_i32_38 = arith.constant 2 : i32
    %44 = arith.addi %1, %c2_i32_38 : i32
    %c0_39 = arith.constant 0 : index
    %45 = arith.index_cast %44 : i32 to index
    %c2_40 = arith.constant 2 : index
    %c0_41 = arith.constant 0 : index
    %46 = vector.load %arg2[%c0_39, %45, %c2_40, %c0_41] : memref<1x20x20x4xbf16, #tpu.memory_space<vmem>>, vector<1x8x16x4xbf16>
    %47 = vector.shape_cast %46 : vector<1x8x16x4xbf16> to vector<8x16x4xbf16>
    %48 = vector.shape_cast %47 : vector<8x16x4xbf16> to vector<128x4xbf16>
    %c4_42 = arith.constant 4 : index
    %c0_43 = arith.constant 0 : index
    %c0_44 = arith.constant 0 : index
    %49 = vector.load %arg3[%c4_42, %c0_43, %c0_44] : memref<9x4x128xbf16, #tpu.memory_space<vmem>>, vector<1x4x128xbf16>
    %50 = vector.shape_cast %49 : vector<1x4x128xbf16> to vector<4x128xbf16>
    %cst_45 = arith.constant dense<0.000000e+00> : vector<128x128xf32>
    %51 = tpu.matmul %48, %50, %cst_45 {dimension_numbers = #tpu.dot_dimension_numbers<[1], [0], [0], [1], [0, 0, 1, 1], [], []>} : vector<128x4xbf16>, vector<4x128xbf16>, vector<128x128xf32> -> vector<128x128xf32>
    %c0_46 = arith.constant 0 : index
    %c0_47 = arith.constant 0 : index
    %52 = vector.load %arg5[%c0_46, %c0_47] : memref<128x128xf32, #tpu.memory_space<vmem>>, vector<128x128xf32>
    %53 = arith.addf %52, %51 : vector<128x128xf32>
    %c0_48 = arith.constant 0 : index
    %c0_49 = arith.constant 0 : index
    %54 = vector.load %arg5[%c0_48, %c0_49] : memref<128x128xf32, #tpu.memory_space<vmem>>, vector<128x128xf32>
    tpu.vector_store %arg5[%c0_48, %c0_49], %53 {strides = array<i32>} : memref<128x128xf32, #tpu.memory_space<vmem>>, vector<128x128xf32>,
    %c2_i32_50 = arith.constant 2 : i32
    %55 = arith.addi %1, %c2_i32_50 : i32
    %c0_51 = arith.constant 0 : index
    %56 = arith.index_cast %55 : i32 to index
    %c4_52 = arith.constant 4 : index
    %c0_53 = arith.constant 0 : index
    %57 = vector.load %arg2[%c0_51, %56, %c4_52, %c0_53] : memref<1x20x20x4xbf16, #tpu.memory_space<vmem>>, vector<1x8x16x4xbf16>
    %58 = vector.shape_cast %57 : vector<1x8x16x4xbf16> to vector<8x16x4xbf16>
    %59 = vector.shape_cast %58 : vector<8x16x4xbf16> to vector<128x4xbf16>
    %c5 = arith.constant 5 : index
    %c0_54 = arith.constant 0 : index
    %c0_55 = arith.constant 0 : index
    %60 = vector.load %arg3[%c5, %c0_54, %c0_55] : memref<9x4x128xbf16, #tpu.memory_space<vmem>>, vector<1x4x128xbf16>
    %61 = vector.shape_cast %60 : vector<1x4x128xbf16> to vector<4x128xbf16>
    %cst_56 = arith.constant dense<0.000000e+00> : vector<128x128xf32>
    %62 = tpu.matmul %59, %61, %cst_56 {dimension_numbers = #tpu.dot_dimension_numbers<[1], [0], [0], [1], [0, 0, 1, 1], [], []>} : vector<128x4xbf16>, vector<4x128xbf16>, vector<128x128xf32> -> vector<128x128xf32>
    %c0_57 = arith.constant 0 : index
    %c0_58 = arith.constant 0 : index
    %63 = vector.load %arg5[%c0_57, %c0_58] : memref<128x128xf32, #tpu.memory_space<vmem>>, vector<128x128xf32>
    %64 = arith.addf %63, %62 : vector<128x128xf32>
    %c0_59 = arith.constant 0 : index
    %c0_60 = arith.constant 0 : index
    %65 = vector.load %arg5[%c0_59, %c0_60] : memref<128x128xf32, #tpu.memory_space<vmem>>, vector<128x128xf32>
    tpu.vector_store %arg5[%c0_59, %c0_60], %64 {strides = array<i32>} : memref<128x128xf32, #tpu.memory_space<vmem>>, vector<128x128xf32>,
    %c4_i32 = arith.constant 4 : i32
    %66 = arith.addi %1, %c4_i32 : i32
    %c0_61 = arith.constant 0 : index
    %67 = arith.index_cast %66 : i32 to index
    %c0_62 = arith.constant 0 : index
    %c0_63 = arith.constant 0 : index
    %68 = vector.load %arg2[%c0_61, %67, %c0_62, %c0_63] : memref<1x20x20x4xbf16, #tpu.memory_space<vmem>>, vector<1x8x16x4xbf16>
    %69 = vector.shape_cast %68 : vector<1x8x16x4xbf16> to vector<8x16x4xbf16>
    %70 = vector.shape_cast %69 : vector<8x16x4xbf16> to vector<128x4xbf16>
    %c6 = arith.constant 6 : index
    %c0_64 = arith.constant 0 : index
    %c0_65 = arith.constant 0 : index
    %71 = vector.load %arg3[%c6, %c0_64, %c0_65] : memref<9x4x128xbf16, #tpu.memory_space<vmem>>, vector<1x4x128xbf16>
    %72 = vector.shape_cast %71 : vector<1x4x128xbf16> to vector<4x128xbf16>
    %cst_66 = arith.constant dense<0.000000e+00> : vector<128x128xf32>
    %73 = tpu.matmul %70, %72, %cst_66 {dimension_numbers = #tpu.dot_dimension_numbers<[1], [0], [0], [1], [0, 0, 1, 1], [], []>} : vector<128x4xbf16>, vector<4x128xbf16>, vector<128x128xf32> -> vector<128x128xf32>
    %c0_67 = arith.constant 0 : index
    %c0_68 = arith.constant 0 : index
    %74 = vector.load %arg5[%c0_67, %c0_68] : memref<128x128xf32, #tpu.memory_space<vmem>>, vector<128x128xf32>
    %75 = arith.addf %74, %73 : vector<128x128xf32>
    %c0_69 = arith.constant 0 : index
    %c0_70 = arith.constant 0 : index
    %76 = vector.load %arg5[%c0_69, %c0_70] : memref<128x128xf32, #tpu.memory_space<vmem>>, vector<128x128xf32>
    tpu.vector_store %arg5[%c0_69, %c0_70], %75 {strides = array<i32>} : memref<128x128xf32, #tpu.memory_space<vmem>>, vector<128x128xf32>,
    %c4_i32_71 = arith.constant 4 : i32
    %77 = arith.addi %1, %c4_i32_71 : i32
    %c0_72 = arith.constant 0 : index
    %78 = arith.index_cast %77 : i32 to index
    %c2_73 = arith.constant 2 : index
    %c0_74 = arith.constant 0 : index
    %79 = vector.load %arg2[%c0_72, %78, %c2_73, %c0_74] : memref<1x20x20x4xbf16, #tpu.memory_space<vmem>>, vector<1x8x16x4xbf16>
    %80 = vector.shape_cast %79 : vector<1x8x16x4xbf16> to vector<8x16x4xbf16>
    %81 = vector.shape_cast %80 : vector<8x16x4xbf16> to vector<128x4xbf16>
    %c7 = arith.constant 7 : index
    %c0_75 = arith.constant 0 : index
    %c0_76 = arith.constant 0 : index
    %82 = vector.load %arg3[%c7, %c0_75, %c0_76] : memref<9x4x128xbf16, #tpu.memory_space<vmem>>, vector<1x4x128xbf16>
    %83 = vector.shape_cast %82 : vector<1x4x128xbf16> to vector<4x128xbf16>
    %cst_77 = arith.constant dense<0.000000e+00> : vector<128x128xf32>
    %84 = tpu.matmul %81, %83, %cst_77 {dimension_numbers = #tpu.dot_dimension_numbers<[1], [0], [0], [1], [0, 0, 1, 1], [], []>} : vector<128x4xbf16>, vector<4x128xbf16>, vector<128x128xf32> -> vector<128x128xf32>
    %c0_78 = arith.constant 0 : index
    %c0_79 = arith.constant 0 : index
    %85 = vector.load %arg5[%c0_78, %c0_79] : memref<128x128xf32, #tpu.memory_space<vmem>>, vector<128x128xf32>
    %86 = arith.addf %85, %84 : vector<128x128xf32>
    %c0_80 = arith.constant 0 : index
    %c0_81 = arith.constant 0 : index
    %87 = vector.load %arg5[%c0_80, %c0_81] : memref<128x128xf32, #tpu.memory_space<vmem>>, vector<128x128xf32>
    tpu.vector_store %arg5[%c0_80, %c0_81], %86 {strides = array<i32>} : memref<128x128xf32, #tpu.memory_space<vmem>>, vector<128x128xf32>,
    %c4_i32_82 = arith.constant 4 : i32
    %88 = arith.addi %1, %c4_i32_82 : i32
    %c0_83 = arith.constant 0 : index
    %89 = arith.index_cast %88 : i32 to index
    %c4_84 = arith.constant 4 : index
    %c0_85 = arith.constant 0 : index
    %90 = vector.load %arg2[%c0_83, %89, %c4_84, %c0_85] : memref<1x20x20x4xbf16, #tpu.memory_space<vmem>>, vector<1x8x16x4xbf16>
    %91 = vector.shape_cast %90 : vector<1x8x16x4xbf16> to vector<8x16x4xbf16>
    %92 = vector.shape_cast %91 : vector<8x16x4xbf16> to vector<128x4xbf16>
    %c8 = arith.constant 8 : index
    %c0_86 = arith.constant 0 : index
    %c0_87 = arith.constant 0 : index
    %93 = vector.load %arg3[%c8, %c0_86, %c0_87] : memref<9x4x128xbf16, #tpu.memory_space<vmem>>, vector<1x4x128xbf16>
    %94 = vector.shape_cast %93 : vector<1x4x128xbf16> to vector<4x128xbf16>
    %cst_88 = arith.constant dense<0.000000e+00> : vector<128x128xf32>
    %95 = tpu.matmul %92, %94, %cst_88 {dimension_numbers = #tpu.dot_dimension_numbers<[1], [0], [0], [1], [0, 0, 1, 1], [], []>} : vector<128x4xbf16>, vector<4x128xbf16>, vector<128x128xf32> -> vector<128x128xf32>
    %c0_89 = arith.constant 0 : index
    %c0_90 = arith.constant 0 : index
    %96 = vector.load %arg5[%c0_89, %c0_90] : memref<128x128xf32, #tpu.memory_space<vmem>>, vector<128x128xf32>
    %97 = arith.addf %96, %95 : vector<128x128xf32>
    %c0_91 = arith.constant 0 : index
    %c0_92 = arith.constant 0 : index
    %98 = vector.load %arg5[%c0_91, %c0_92] : memref<128x128xf32, #tpu.memory_space<vmem>>, vector<128x128xf32>
    tpu.vector_store %arg5[%c0_91, %c0_92], %97 {strides = array<i32>} : memref<128x128xf32, #tpu.memory_space<vmem>>, vector<128x128xf32>,
    %c0_93 = arith.constant 0 : index
    %c0_94 = arith.constant 0 : index
    %99 = vector.load %arg5[%c0_93, %c0_94] : memref<128x128xf32, #tpu.memory_space<vmem>>, vector<128x128xf32>
    %cst_95 = arith.constant dense<0.000000e+00> : vector<128xf32>
    %100 = vector.multi_reduction <add>, %99, %cst_95 [0] : vector<128x128xf32> to vector<128xf32>
    %101 = vector.shape_cast %100 : vector<128xf32> to vector<1x128xf32>
    %102 = arith.mulf %99, %99 : vector<128x128xf32>
    %cst_96 = arith.constant dense<0.000000e+00> : vector<128xf32>
    %103 = vector.multi_reduction <add>, %102, %cst_96 [0] : vector<128x128xf32> to vector<128xf32>
    %104 = vector.shape_cast %103 : vector<128xf32> to vector<1x128xf32>
    %105 = tpu.concatenate %101, %104 in 0 : vector<1x128xf32>, vector<1x128xf32> -> vector<2x128xf32>
    %c0_97 = arith.constant 0 : index
    %c0_98 = arith.constant 0 : index
    %c0_99 = arith.constant 0 : index
    %c0_100 = arith.constant 0 : index
    %106 = vector.load %arg4[%c0_97, %c0_98, %c0_99, %c0_100] : memref<1x1x2x128xf32, #tpu.memory_space<vmem>>, vector<1x1x2x128xf32>
    %107 = vector.shape_cast %106 : vector<1x1x2x128xf32> to vector<2x128xf32>
    %108 = vector.shape_cast %105 : vector<2x128xf32> to vector<1x1x2x128xf32>
    tpu.vector_store %arg4[%c0_97, %c0_98, %c0_99, %c0_100], %108 {strides = array<i32>} : memref<1x1x2x128xf32, #tpu.memory_space<vmem>>, vector<1x1x2x128xf32>,
    return
  }
  func.func @transform_0(%arg0: i32, %arg1: i32) -> (i32, i32, i32, i32) {
    %c0_i32 = arith.constant 0 : i32
    %c0_i32_0 = arith.constant 0 : i32
    %c0_i32_1 = arith.constant 0 : i32
    %c0_i32_2 = arith.constant 0 : i32
    return %arg0, %c0_i32, %c0_i32_0, %c0_i32_1 : i32, i32, i32, i32
  }
  func.func @transform_1(%arg0: i32, %arg1: i32) -> (i32, i32, i32) {
    %c0_i32 = arith.constant 0 : i32
    %c0_i32_0 = arith.constant 0 : i32
    %c0_i32_1 = arith.constant 0 : i32
    %c0_i32_2 = arith.constant 0 : i32
    return %c0_i32, %c0_i32_0, %c0_i32_1 : i32, i32, i32
  }
  func.func @transform_2(%arg0: i32, %arg1: i32) -> (i32, i32, i32, i32) {
    %c0_i32 = arith.constant 0 : i32
    %c0_i32_0 = arith.constant 0 : i32
    %c0_i32_1 = arith.constant 0 : i32
    return %arg0, %arg1, %c0_i32, %c0_i32_0 : i32, i32, i32, i32
  }
}

</mosaic_0001>

<llo_original>
// kernel: tpu_custom_call.1
$region0: #{tpu_custom_call.1}
  #allocation0 [shape = 'u32[]', space=smem, size = 0x4, offset = 0x4, fixed_abs, tag = 'smem constant byte address 0x4 - core index']
  #allocation1 [shape = 'u32[72,128]{1,0:T(1,128)}', space=vmem, size = 0x9000, scoped, tag = 'internal scratch']
  #allocation2 [shape = 'f32[128,128]{1,0:T(8,128)}', space=vmem, size = 0x10000, scoped, tag = 'scratch operand']
  %s0 = inlined_call_operand.vmem [shape: bf16[2,20,20,4], index: 0, kind: input, shape index: {}]
  %s1 = inlined_call_operand.vmem [shape: bf16[9,4,128], index: 1, kind: input, shape index: {}]
  %s2 = inlined_call_operand.hbm [shape: f32[2,2,2,128], index: 2, kind: output, shape index: {}]
  %s3 = sld [smem:[#allocation0]]
  $region41: #{tpu_custom_call.1} parent=0
    _
  %s5 = ssub.s32 1, %s3
  %s6 = scalar_select 0, %s5, %s3
  $region1: #{tpu_custom_call.1} parent=0
    #allocation3 [shape = 'u8[2048]{0}', space=vmem, size = 0x800, scoped, tag = 'output window, operand 0']
    #allocation4 [shape = 's32[2]{0}', space=sflag, size = 0x8, scoped, tag = 'scoped memory for tpu_custom_call.1']
    %7 = vsyncpa [#allocation4], 0
    %s8 = scalar_lea.sflag [#allocation4], 1
    %9 = vsyncpa %s8, 0
    loop: start=0, step=1, limit=6
    $region2: #{tpu_custom_call.1} parent=1 // loop_pre_header
      _
    $region3: #{tpu_custom_call.1} parent=1 // loop_header
      %s11 = sphi 0, %s15
      %p12 = scmp.ge.s32.totalorder %s11, 6
      %s18 = sphi 0, %s30
      %s19 = sphi 0, %s26
      %s20 = sphi 0, %s18
      %s21 = sphi 0, %s19
      %s22 = sphi 0, %s20
      %s23 = sphi 0, %s21
      %s33 = sphi 0, %s35
      %s36 = sphi 0, %s33
      %s37 = sphi 0, %s36
      %s53 = sphi 0, %s37
      %s57 = sphi 0, %s57
      %s59 = sphi 0, %s57
      %s60 = sphi 0, %s59
      %s74 = sphi 0, %s60
      %s82 = sphi 0, %s84
      %s85 = sphi 0, %s82
      %s86 = sphi 0, %s85
      %s102 = sphi 0, %s86
    $region4: #{tpu_custom_call.1} parent=1 // loop_header_branch
      %14 = sbr.rel (%p12) target = $region8
    $region5: #{tpu_custom_call.1} parent=1 // loop_body
      %s16 = ssub.s32 %s11, 1
      %s17 = ssub.s32 %s11, 2
      %s24 = sadd.s32 1, %s19
      %p25 = scmp.ge.s32.totalorder %s24, 2
      %s26 = scalar_select %p25, 0, %s24
      %s27 = sadd.s32 1, %s18
      %s28 = scalar_select %p25, %s27, %s18
      %p29 = scmp.ge.s32.totalorder %s28, 2
      %s30 = scalar_select %p29, 0, %s28
      %s31 = ssub.s32 %s18, %s30
      %p32 = scmp.eq.s32.totalorder %s31, 0
      %s34 = sadd.s32 %s33, 1
      %s35 = scalar_select %p32, %s33, %s34
      %p38 = pneg %p32
      %p39 = scmp.eq.s32.totalorder %s11, 3
      %p40 = por %p38, %p39
      %p41 = scmp.ne.s32.totalorder %s33, %s36
      %p42 = scmp.eq.s32.totalorder %s11, 0
      %p43 = por %p41, %p42
      %p44 = scmp.ne.s32.totalorder %s33, %s36
      %p45 = scmp.eq.s32.totalorder %s16, 3
      %p46 = por %p44, %p45
      %p47 = scmp.ne.s32.totalorder %s36, %s37
      %p48 = scmp.eq.s32.totalorder %s16, 0
      %p49 = por %p47, %p48
      %p50 = scmp.ne.s32.totalorder %s36, %s37
      %p51 = scmp.eq.s32.totalorder %s17, 3
      %p52 = por %p50, %p51
      %p54 = scmp.ne.s32.totalorder %s37, %s53
      %p55 = scmp.eq.s32.totalorder %s17, 0
      %p56 = por %p54, %p55
      %s58 = sadd.s32 %s57, 1
      %p61 = scmp.eq.s32.totalorder %s11, 3
      %p62 = scmp.ne.s32.totalorder %s57, %s59
      %p63 = scmp.eq.s32.totalorder %s11, 0
      %p64 = por %p62, %p63
      %p65 = scmp.ne.s32.totalorder %s57, %s59
      %p66 = scmp.eq.s32.totalorder %s16, 3
      %p67 = por %p65, %p66
      %p68 = scmp.ne.s32.totalorder %s59, %s60
      %p69 = scmp.eq.s32.totalorder %s16, 0
      %p70 = por %p68, %p69
      %p71 = scmp.ne.s32.totalorder %s59, %s60
      %p72 = scmp.eq.s32.totalorder %s17, 3
      %p73 = por %p71, %p72
      %p75 = scmp.ne.s32.totalorder %s60, %s74
      %p76 = scmp.eq.s32.totalorder %s17, 0
      %p77 = por %p75, %p76
      %s78 = ssub.s32 %s18, %s30
      %s79 = ssub.s32 %s19, %s26
      %s80 = sor.u32 %s78, %s79
      %p81 = scmp.eq.s32.totalorder %s80, 0
      %s83 = sadd.s32 %s82, 1
      %s84 = scalar_select %p81, %s82, %s83
      %p87 = pneg %p81
      %p88 = scmp.eq.s32.totalorder %s11, 3
      %p89 = por %p87, %p88
      %p90 = scmp.ne.s32.totalorder %s82, %s85
      %p91 = scmp.eq.s32.totalorder %s11, 0
      %p92 = por %p90, %p91
      %p93 = scmp.ne.s32.totalorder %s82, %s85
      %p94 = scmp.eq.s32.totalorder %s16, 3
      %p95 = por %p93, %p94
      %p96 = scmp.ne.s32.totalorder %s85, %s86
      %p97 = scmp.eq.s32.totalorder %s16, 0
      %p98 = por %p96, %p97
      %p99 = scmp.ne.s32.totalorder %s85, %s86
      %p100 = scmp.eq.s32.totalorder %s17, 3
      %p101 = por %p99, %p100
      %p103 = scmp.ne.s32.totalorder %s86, %s102
      %p104 = scmp.eq.s32.totalorder %s17, 0
      %p105 = por %p103, %p104
      %p106 = scmp.le.s32.totalorder 1, %s11
      %p107 = scmp.lt.s32.totalorder %s11, 5
      %p108 = pnand %p106, %p107
      %p109 = pneg %p108
      // Predicated region
      $region9: #{tpu_custom_call.1} parent=5 // pred_check
        _
      $region10: #{tpu_custom_call.1} parent=5 // pred_check_branch
        %111 = sbr.rel (%p108) target = $region12
      $region11: #{tpu_custom_call.1} parent=5 // pred_region
        %s112 = ssub.s32 %s11, 1
        // Predicated region
        $region13: #{tpu_custom_call.1} parent=11 // pred_check
          %p113 = pneg %p70
        $region14: #{tpu_custom_call.1} parent=11 // pred_check_branch
          %115 = sbr.rel (%p113) target = $region16
        $region15: #{tpu_custom_call.1} parent=11 // pred_region
          _
        $region16: #{tpu_custom_call.1} parent=11 // pred_fallthru
          _
      $region12: #{tpu_custom_call.1} parent=5 // pred_fallthru
        _
      %p116 = scmp.lt.s32.totalorder %s11, 4
      // Predicated region
      $region17: #{tpu_custom_call.1} parent=5 // pred_check
        %p117 = pneg %p116
      $region18: #{tpu_custom_call.1} parent=5 // pred_check_branch
        %119 = sbr.rel (%p117) target = $region20
      $region19: #{tpu_custom_call.1} parent=5 // pred_region
        // Predicated region
        $region21: #{tpu_custom_call.1} parent=19 // pred_check
          %p120 = pneg %p43
        $region22: #{tpu_custom_call.1} parent=19 // pred_check_branch
          %122 = sbr.rel (%p120) target = $region24
        $region23: #{tpu_custom_call.1} parent=19 // pred_region
          %p123 = scmp.lt.s32.totalorder %s18, 1
          %s124 = scalar_select %p123, %s18, 1
          %s125 = smul.addr %s124, 60
          %s126 = smul.addr %s125, 4
          %s127 = scalar_lea.vmem %s0, %s126
        $region24: #{tpu_custom_call.1} parent=19 // pred_fallthru
          _
      $region20: #{tpu_custom_call.1} parent=5 // pred_fallthru
        _
      %p128 = scmp.le.s32.totalorder 1, %s11
      %p129 = scmp.lt.s32.totalorder %s11, 5
      %p130 = pnand %p128, %p129
      %p131 = pneg %p130
      // Predicated region
      $region25: #{tpu_custom_call.1} parent=5 // pred_check
        _
      $region26: #{tpu_custom_call.1} parent=5 // pred_check_branch
        %133 = sbr.rel (%p130) target = $region28
      $region27: #{tpu_custom_call.1} parent=5 // pred_region
        %s134 = ssub.s32 %s11, 1
        %p135 = scmp.lt.s32.totalorder %s20, 1
        %s136 = scalar_select %p135, %s20, 1
        %s137 = smul.addr %s136, 60
        %s138 = smul.addr %s137, 4
        %s139 = scalar_lea.vmem %s0, %s138
        %p140 = pneg %p49
        %p141 = pneg %p46
        %p142 = pneg %p70
        %p143 = pneg %p67
        %p144 = pneg %p98
        %p145 = pneg %p95
        %s146 = sand.u32 %s85, 1
        %s147 = scalar_lea.sflag [#allocation4], %s146
        %s148 = sand.u32 %s85, 1
        %s149 = smul.addr %s148, 2
        %s150 = scalar_lea.vmem [#allocation3], %s149
        %p151 = scmp.lt.s32.totalorder %s20, 1
        %s152 = scalar_select %p151, %s20, 1
        %s153 = smul.addr %s152, 60
        %s154 = smul.addr %s153, 4
        %s155 = scalar_lea.vmem %s0, %s154
        %s157 = smul.u32 %s21, 8
        %s158 = smul.u32 %s157, 3
        %s159 = smul.addr %s158, 4
        %s160 = scalar_lea.vmem %s155, %s159
        %v161 = vld [vmem:[%s160] sm:$0xf]
        %v162 = vld [vmem:[%s160 + $0x4] sm:$0xf]
        %v163 = vld [vmem:[%s160 + $0xc] sm:$0xf]
        %v164 = vld [vmem:[%s160 + $0x10] sm:$0xf]
        %v165 = vld [vmem:[%s160 + $0x18] sm:$0xf]
        %v166 = vld [vmem:[%s160 + $0x1c] sm:$0xf]
        %v167 = vld [vmem:[%s160 + $0x24] sm:$0xf]
        %v168 = vld [vmem:[%s160 + $0x28] sm:$0xf]
        %v169 = vld [vmem:[%s160 + $0x30] sm:$0xf]
        %v170 = vld [vmem:[%s160 + $0x34] sm:$0xf]
        %v171 = vld [vmem:[%s160 + $0x3c] sm:$0xf]
        %v172 = vld [vmem:[%s160 + $0x40] sm:$0xf]
        %v173 = vld [vmem:[%s160 + $0x48] sm:$0xf]
        %v174 = vld [vmem:[%s160 + $0x4c] sm:$0xf]
        %v175 = vld [vmem:[%s160 + $0x54] sm:$0xf]
        %v176 = vld [vmem:[%s160 + $0x58] sm:$0xf]
        %v177 = vld [vmem:[%s1] sm:$0x3]
        %v194 = vunpack.c.l.b16 %v161
        %v195 = vunpack.c.l.b16 %v162
        %v196 = vunpack.c.l.b16 %v163
        %v197 = vunpack.c.l.b16 %v164
        %v198 = vunpack.c.l.b16 %v165
        %v199 = vunpack.c.l.b16 %v166
        %v200 = vunpack.c.l.b16 %v167
        %v201 = vunpack.c.l.b16 %v168
        %v202 = vunpack.c.l.b16 %v169
        %v203 = vunpack.c.l.b16 %v170
        %v204 = vunpack.c.l.b16 %v171
        %v205 = vunpack.c.l.b16 %v172
        %v206 = vunpack.c.l.b16 %v173
        %v207 = vunpack.c.l.b16 %v174
        %v208 = vunpack.c.l.b16 %v175
        %v209 = vunpack.c.l.b16 %v176
        %v210 = vpack.c.b16 %v195, %v194
        %v211 = vpack.c.b16 %v197, %v196
        %v212 = vpack.c.b16 %v199, %v198
        %v213 = vpack.c.b16 %v201, %v200
        %v214 = vpack.c.b16 %v203, %v202
        %v215 = vpack.c.b16 %v205, %v204
        %v216 = vpack.c.b16 %v207, %v206
        %v217 = vpack.c.b16 %v209, %v208
        %vm218 = vcmask 31744
        %v220 = vsel %vm218, %v210, 0
        %v223 = vsel %vm218, %v211, 0
        %v226 = vsel %vm218, %v212, 0
        %v229 = vsel %vm218, %v213, 0
        %v232 = vsel %vm218, %v214, 0
        %v235 = vsel %vm218, %v215, 0
        %v238 = vsel %vm218, %v216, 0
        %v241 = vsel %vm218, %v217, 0
        %vm243 = vcmask 1041408
        %v245 = vsel %vm243, %v177, 0
        %247 = vmatpush.bf16.msra.mxu0 0
        %248 = vmatpush.bf16.msra.mxu0 0
        %249 = vmatpush.bf16.msra.mxu0 0
        %250 = vmatpush.bf16.msra.mxu0 0
        %251 = vmatpush.bf16.msra.mxu0 0
        %252 = vmatpush.bf16.msra.mxu0 0
        %253 = vmatpush.bf16.msra.mxu0 0
        %254 = vmatpush.bf16.msra.mxu0 %v245
        %255 = vmatmul.bf16.gmra.mxu0 %v220
        %v256 = vpop.f32.mrf.mxu0
        %v257 = vadd.f32 0.0, %v256
        %v258 = vpop.f32.mrf.mxu0
        %v259 = vadd.f32 0.0, %v258
        %260 = vmatmul.bf16.gmra.mxu0 %v223
        %v261 = vpop.f32.mrf.mxu0
        %v262 = vadd.f32 0.0, %v261
        %v263 = vpop.f32.mrf.mxu0
        %v264 = vadd.f32 0.0, %v263
        %265 = vmatmul.bf16.gmra.mxu0 %v226
        %v266 = vpop.f32.mrf.mxu0
        %v267 = vadd.f32 0.0, %v266
        %v268 = vpop.f32.mrf.mxu0
        %v269 = vadd.f32 0.0, %v268
        %270 = vmatmul.bf16.gmra.mxu0 %v229
        %v271 = vpop.f32.mrf.mxu0
        %v272 = vadd.f32 0.0, %v271
        %v273 = vpop.f32.mrf.mxu0
        %v274 = vadd.f32 0.0, %v273
        %275 = vmatmul.bf16.gmra.mxu0 %v232
        %v276 = vpop.f32.mrf.mxu0
        %v277 = vadd.f32 0.0, %v276
        %v278 = vpop.f32.mrf.mxu0
        %v279 = vadd.f32 0.0, %v278
        %280 = vmatmul.bf16.gmra.mxu0 %v235
        %v281 = vpop.f32.mrf.mxu0
        %v282 = vadd.f32 0.0, %v281
        %v283 = vpop.f32.mrf.mxu0
        %v284 = vadd.f32 0.0, %v283
        %285 = vmatmul.bf16.gmra.mxu0 %v238
        %v286 = vpop.f32.mrf.mxu0
        %v287 = vadd.f32 0.0, %v286
        %v288 = vpop.f32.mrf.mxu0
        %v289 = vadd.f32 0.0, %v288
        %290 = vmatmul.bf16.gmra.mxu0 %v241
        %v291 = vpop.f32.mrf.mxu0
        %v292 = vadd.f32 0.0, %v291
        %v293 = vpop.f32.mrf.mxu0
        %v294 = vadd.f32 0.0, %v293
        %295 = vdwg.mxu0
        %296 = vst [vmem:[#allocation2] sm:$0xff] %v257
        %297 = vst [vmem:[#allocation2 + $0x8] sm:$0xff] %v259
        %298 = vst [vmem:[#allocation2 + $0x10] sm:$0xff] %v262
        %299 = vst [vmem:[#allocation2 + $0x18] sm:$0xff] %v264
        %300 = vst [vmem:[#allocation2 + $0x20] sm:$0xff] %v267
        %301 = vst [vmem:[#allocation2 + $0x28] sm:$0xff] %v269
        %302 = vst [vmem:[#allocation2 + $0x30] sm:$0xff] %v272
        %303 = vst [vmem:[#allocation2 + $0x38] sm:$0xff] %v274
        %304 = vst [vmem:[#allocation2 + $0x40] sm:$0xff] %v277
        %305 = vst [vmem:[#allocation2 + $0x48] sm:$0xff] %v279
        %306 = vst [vmem:[#allocation2 + $0x50] sm:$0xff] %v282
        %307 = vst [vmem:[#allocation2 + $0x58] sm:$0xff] %v284
        %308 = vst [vmem:[#allocation2 + $0x60] sm:$0xff] %v287
        %309 = vst [vmem:[#allocation2 + $0x68] sm:$0xff] %v289
        %310 = vst [vmem:[#allocation2 + $0x70] sm:$0xff] %v292
        %311 = vst [vmem:[#allocation2 + $0x78] sm:$0xff] %v294
        %v312 = vld [vmem:[%s160] sm:$0xe]
        %v313 = vld [vmem:[%s160 + $0x4] sm:$0xf]
        %v314 = vld [vmem:[%s160 + $0x8] sm:$0x1]
        %v315 = vld [vmem:[%s160 + $0xc] sm:$0xe]
        %v316 = vld [vmem:[%s160 + $0x10] sm:$0xf]
        %v317 = vld [vmem:[%s160 + $0x14] sm:$0x1]
        %v318 = vld [vmem:[%s160 + $0x18] sm:$0xe]
        %v319 = vld [vmem:[%s160 + $0x1c] sm:$0xf]
        %v320 = vld [vmem:[%s160 + $0x20] sm:$0x1]
        %v321 = vld [vmem:[%s160 + $0x24] sm:$0xe]
        %v322 = vld [vmem:[%s160 + $0x28] sm:$0xf]
        %v323 = vld [vmem:[%s160 + $0x2c] sm:$0x1]
        %v324 = vld [vmem:[%s160 + $0x30] sm:$0xe]
        %v325 = vld [vmem:[%s160 + $0x34] sm:$0xf]
        %v326 = vld [vmem:[%s160 + $0x38] sm:$0x1]
        %v327 = vld [vmem:[%s160 + $0x3c] sm:$0xe]
        %v328 = vld [vmem:[%s160 + $0x40] sm:$0xf]
        %v329 = vld [vmem:[%s160 + $0x44] sm:$0x1]
        %v330 = vld [vmem:[%s160 + $0x48] sm:$0xe]
        %v331 = vld [vmem:[%s160 + $0x4c] sm:$0xf]
        %v332 = vld [vmem:[%s160 + $0x50] sm:$0x1]
        %v333 = vld [vmem:[%s160 + $0x54] sm:$0xe]
        %v334 = vld [vmem:[%s160 + $0x58] sm:$0xf]
        %v335 = vld [vmem:[%s160 + $0x5c] sm:$0x1]
        %vm360 = vcmask 1042432
        %vm361 = vcmask 1046532
        %vm362 = vmor %vm360, %vm361
        %v363 = vrot.slane %v312, 5
        %v364 = vrot.slane %v363, 4
        %v365 = vrot.slane %v313, 5
        %v366 = vsel %vm362, %v364, %v365
        %v367 = vrot.slane %v365, 4
        %v368 = vrot.slane %v314, 5
        %v369 = vsel %vm362, %v367, %v368
        %v370 = vrot.slane %v315, 5
        %v371 = vrot.slane %v370, 4
        %v372 = vrot.slane %v316, 5
        %v373 = vsel %vm362, %v371, %v372
        %v374 = vrot.slane %v372, 4
        %v375 = vrot.slane %v317, 5
        %v376 = vsel %vm362, %v374, %v375
        %v377 = vrot.slane %v318, 5
        %v378 = vrot.slane %v377, 4
        %v379 = vrot.slane %v319, 5
        %v380 = vsel %vm362, %v378, %v379
        %v381 = vrot.slane %v379, 4
        %v382 = vrot.slane %v320, 5
        %v383 = vsel %vm362, %v381, %v382
        %v384 = vrot.slane %v321, 5
        %v385 = vrot.slane %v384, 4
        %v386 = vrot.slane %v322, 5
        %v387 = vsel %vm362, %v385, %v386
        %v388 = vrot.slane %v386, 4
        %v389 = vrot.slane %v323, 5
        %v390 = vsel %vm362, %v388, %v389
        %v391 = vrot.slane %v324, 5
        %v392 = vrot.slane %v391, 4
        %v393 = vrot.slane %v325, 5
        %v394 = vsel %vm362, %v392, %v393
        %v395 = vrot.slane %v393, 4
        %v396 = vrot.slane %v326, 5
        %v397 = vsel %vm362, %v395, %v396
        %v398 = vrot.slane %v327, 5
        %v399 = vrot.slane %v398, 4
        %v400 = vrot.slane %v328, 5
        %v401 = vsel %vm362, %v399, %v400
        %v402 = vrot.slane %v400, 4
        %v403 = vrot.slane %v329, 5
        %v404 = vsel %vm362, %v402, %v403
        %v405 = vrot.slane %v330, 5
        %v406 = vrot.slane %v405, 4
        %v407 = vrot.slane %v331, 5
        %v408 = vsel %vm362, %v406, %v407
        %v409 = vrot.slane %v407, 4
        %v410 = vrot.slane %v332, 5
        %v411 = vsel %vm362, %v409, %v410
        %v412 = vrot.slane %v333, 5
        %v413 = vrot.slane %v412, 4
        %v414 = vrot.slane %v334, 5
        %v415 = vsel %vm362, %v413, %v414
        %v416 = vrot.slane %v414, 4
        %v417 = vrot.slane %v335, 5
        %v418 = vsel %vm362, %v416, %v417
        %s419 = scalar_lea.vmem %s1, 2
        %v420 = vld [vmem:[%s419] sm:$0x3]
        %v421 = vunpack.c.l.b16 %v366
        %v422 = vunpack.c.l.b16 %v369
        %v423 = vunpack.c.l.b16 %v373
        %v424 = vunpack.c.l.b16 %v376
        %v425 = vunpack.c.l.b16 %v380
        %v426 = vunpack.c.l.b16 %v383
        %v427 = vunpack.c.l.b16 %v387
        %v428 = vunpack.c.l.b16 %v390
        %v429 = vunpack.c.l.b16 %v394
        %v430 = vunpack.c.l.b16 %v397
        %v431 = vunpack.c.l.b16 %v401
        %v432 = vunpack.c.l.b16 %v404
        %v433 = vunpack.c.l.b16 %v408
        %v434 = vunpack.c.l.b16 %v411
        %v435 = vunpack.c.l.b16 %v415
        %v436 = vunpack.c.l.b16 %v418
        %v437 = vpack.c.b16 %v422, %v421
        %v438 = vpack.c.b16 %v424, %v423
        %v439 = vpack.c.b16 %v426, %v425
        %v440 = vpack.c.b16 %v428, %v427
        %v441 = vpack.c.b16 %v430, %v429
        %v442 = vpack.c.b16 %v432, %v431
        %v443 = vpack.c.b16 %v434, %v433
        %v444 = vpack.c.b16 %v436, %v435
        %v446 = vsel %vm218, %v437, 0
        %v449 = vsel %vm218, %v438, 0
        %v452 = vsel %vm218, %v439, 0
        %v455 = vsel %vm218, %v440, 0
        %v458 = vsel %vm218, %v441, 0
        %v461 = vsel %vm218, %v442, 0
        %v464 = vsel %vm218, %v443, 0
        %v467 = vsel %vm218, %v444, 0
        %v470 = vsel %vm243, %v420, 0
        %472 = vmatpush.bf16.msra.mxu0 0
        %473 = vmatpush.bf16.msra.mxu0 0
        %474 = vmatpush.bf16.msra.mxu0 0
        %475 = vmatpush.bf16.msra.mxu0 0
        %476 = vmatpush.bf16.msra.mxu0 0
        %477 = vmatpush.bf16.msra.mxu0 0
        %478 = vmatpush.bf16.msra.mxu0 0
        %479 = vmatpush.bf16.msra.mxu0 %v470
        %480 = vmatmul.bf16.gmra.mxu0 %v446
        %v481 = vpop.f32.mrf.mxu0
        %v482 = vadd.f32 0.0, %v481
        %v483 = vpop.f32.mrf.mxu0
        %v484 = vadd.f32 0.0, %v483
        %485 = vmatmul.bf16.gmra.mxu0 %v449
        %v486 = vpop.f32.mrf.mxu0
        %v487 = vadd.f32 0.0, %v486
        %v488 = vpop.f32.mrf.mxu0
        %v489 = vadd.f32 0.0, %v488
        %490 = vmatmul.bf16.gmra.mxu0 %v452
        %v491 = vpop.f32.mrf.mxu0
        %v492 = vadd.f32 0.0, %v491
        %v493 = vpop.f32.mrf.mxu0
        %v494 = vadd.f32 0.0, %v493
        %495 = vmatmul.bf16.gmra.mxu0 %v455
        %v496 = vpop.f32.mrf.mxu0
        %v497 = vadd.f32 0.0, %v496
        %v498 = vpop.f32.mrf.mxu0
        %v499 = vadd.f32 0.0, %v498
        %500 = vmatmul.bf16.gmra.mxu0 %v458
        %v501 = vpop.f32.mrf.mxu0
        %v502 = vadd.f32 0.0, %v501
        %v503 = vpop.f32.mrf.mxu0
        %v504 = vadd.f32 0.0, %v503
        %505 = vmatmul.bf16.gmra.mxu0 %v461
        %v506 = vpop.f32.mrf.mxu0
        %v507 = vadd.f32 0.0, %v506
        %v508 = vpop.f32.mrf.mxu0
        %v509 = vadd.f32 0.0, %v508
        %510 = vmatmul.bf16.gmra.mxu0 %v464
        %v511 = vpop.f32.mrf.mxu0
        %v512 = vadd.f32 0.0, %v511
        %v513 = vpop.f32.mrf.mxu0
        %v514 = vadd.f32 0.0, %v513
        %515 = vmatmul.bf16.gmra.mxu0 %v467
        %v516 = vpop.f32.mrf.mxu0
        %v517 = vadd.f32 0.0, %v516
        %v518 = vpop.f32.mrf.mxu0
        %v519 = vadd.f32 0.0, %v518
        %520 = vdwg.mxu0
        %v521 = vld [vmem:[#allocation2] sm:$0xff]
        %v522 = vld [vmem:[#allocation2 + $0x8] sm:$0xff]
        %v523 = vld [vmem:[#allocation2 + $0x10] sm:$0xff]
        %v524 = vld [vmem:[#allocation2 + $0x18] sm:$0xff]
        %v525 = vld [vmem:[#allocation2 + $0x20] sm:$0xff]
        %v526 = vld [vmem:[#allocation2 + $0x28] sm:$0xff]
        %v527 = vld [vmem:[#allocation2 + $0x30] sm:$0xff]
        %v528 = vld [vmem:[#allocation2 + $0x38] sm:$0xff]
        %v529 = vld [vmem:[#allocation2 + $0x40] sm:$0xff]
        %v530 = vld [vmem:[#allocation2 + $0x48] sm:$0xff]
        %v531 = vld [vmem:[#allocation2 + $0x50] sm:$0xff]
        %v532 = vld [vmem:[#allocation2 + $0x58] sm:$0xff]
        %v533 = vld [vmem:[#allocation2 + $0x60] sm:$0xff]
        %v534 = vld [vmem:[#allocation2 + $0x68] sm:$0xff]
        %v535 = vld [vmem:[#allocation2 + $0x70] sm:$0xff]
        %v536 = vld [vmem:[#allocation2 + $0x78] sm:$0xff]
        %v537 = vadd.f32 %v521, %v482
        %v538 = vadd.f32 %v522, %v484
        %v539 = vadd.f32 %v523, %v487
        %v540 = vadd.f32 %v524, %v489
        %v541 = vadd.f32 %v525, %v492
        %v542 = vadd.f32 %v526, %v494
        %v543 = vadd.f32 %v527, %v497
        %v544 = vadd.f32 %v528, %v499
        %v545 = vadd.f32 %v529, %v502
        %v546 = vadd.f32 %v530, %v504
        %v547 = vadd.f32 %v531, %v507
        %v548 = vadd.f32 %v532, %v509
        %v549 = vadd.f32 %v533, %v512
        %v550 = vadd.f32 %v534, %v514
        %v551 = vadd.f32 %v535, %v517
        %v552 = vadd.f32 %v536, %v519
        %553 = vst [vmem:[#allocation2] sm:$0xff] %v537
        %554 = vst [vmem:[#allocation2 + $0x8] sm:$0xff] %v538
        %555 = vst [vmem:[#allocation2 + $0x10] sm:$0xff] %v539
        %556 = vst [vmem:[#allocation2 + $0x18] sm:$0xff] %v540
        %557 = vst [vmem:[#allocation2 + $0x20] sm:$0xff] %v541
        %558 = vst [vmem:[#allocation2 + $0x28] sm:$0xff] %v542
        %559 = vst [vmem:[#allocation2 + $0x30] sm:$0xff] %v543
        %560 = vst [vmem:[#allocation2 + $0x38] sm:$0xff] %v544
        %561 = vst [vmem:[#allocation2 + $0x40] sm:$0xff] %v545
        %562 = vst [vmem:[#allocation2 + $0x48] sm:$0xff] %v546
        %563 = vst [vmem:[#allocation2 + $0x50] sm:$0xff] %v547
        %564 = vst [vmem:[#allocation2 + $0x58] sm:$0xff] %v548
        %565 = vst [vmem:[#allocation2 + $0x60] sm:$0xff] %v549
        %566 = vst [vmem:[#allocation2 + $0x68] sm:$0xff] %v550
        %567 = vst [vmem:[#allocation2 + $0x70] sm:$0xff] %v551
        %568 = vst [vmem:[#allocation2 + $0x78] sm:$0xff] %v552
        %v569 = vld [vmem:[%s160] sm:$0xc]
        %v570 = vld [vmem:[%s160 + $0x4] sm:$0xf]
        %v571 = vld [vmem:[%s160 + $0x8] sm:$0x3]
        %v572 = vld [vmem:[%s160 + $0xc] sm:$0xc]
        %v573 = vld [vmem:[%s160 + $0x10] sm:$0xf]
        %v574 = vld [vmem:[%s160 + $0x14] sm:$0x3]
        %v575 = vld [vmem:[%s160 + $0x18] sm:$0xc]
        %v576 = vld [vmem:[%s160 + $0x1c] sm:$0xf]
        %v577 = vld [vmem:[%s160 + $0x20] sm:$0x3]
        %v578 = vld [vmem:[%s160 + $0x24] sm:$0xc]
        %v579 = vld [vmem:[%s160 + $0x28] sm:$0xf]
        %v580 = vld [vmem:[%s160 + $0x2c] sm:$0x3]
        %v581 = vld [vmem:[%s160 + $0x30] sm:$0xc]
        %v582 = vld [vmem:[%s160 + $0x34] sm:$0xf]
        %v583 = vld [vmem:[%s160 + $0x38] sm:$0x3]
        %v584 = vld [vmem:[%s160 + $0x3c] sm:$0xc]
        %v585 = vld [vmem:[%s160 + $0x40] sm:$0xf]
        %v586 = vld [vmem:[%s160 + $0x44] sm:$0x3]
        %v587 = vld [vmem:[%s160 + $0x48] sm:$0xc]
        %v588 = vld [vmem:[%s160 + $0x4c] sm:$0xf]
        %v589 = vld [vmem:[%s160 + $0x50] sm:$0x3]
        %v590 = vld [vmem:[%s160 + $0x54] sm:$0xc]
        %v591 = vld [vmem:[%s160 + $0x58] sm:$0xf]
        %v592 = vld [vmem:[%s160 + $0x5c] sm:$0x3]
        %vm617 = vcmask 1041408
        %vm618 = vcmask 1045508
        %vm619 = vmor %vm617, %vm618
        %v620 = vrot.slane %v569, 6
        %v621 = vrot.slane %v620, 4
        %v622 = vrot.slane %v570, 6
        %v623 = vsel %vm619, %v621, %v622
        %v624 = vrot.slane %v622, 4
        %v625 = vrot.slane %v571, 6
        %v626 = vsel %vm619, %v624, %v625
        %v627 = vrot.slane %v572, 6
        %v628 = vrot.slane %v627, 4
        %v629 = vrot.slane %v573, 6
        %v630 = vsel %vm619, %v628, %v629
        %v631 = vrot.slane %v629, 4
        %v632 = vrot.slane %v574, 6
        %v633 = vsel %vm619, %v631, %v632
        %v634 = vrot.slane %v575, 6
        %v635 = vrot.slane %v634, 4
        %v636 = vrot.slane %v576, 6
        %v637 = vsel %vm619, %v635, %v636
        %v638 = vrot.slane %v636, 4
        %v639 = vrot.slane %v577, 6
        %v640 = vsel %vm619, %v638, %v639
        %v641 = vrot.slane %v578, 6
        %v642 = vrot.slane %v641, 4
        %v643 = vrot.slane %v579, 6
        %v644 = vsel %vm619, %v642, %v643
        %v645 = vrot.slane %v643, 4
        %v646 = vrot.slane %v580, 6
        %v647 = vsel %vm619, %v645, %v646
        %v648 = vrot.slane %v581, 6
        %v649 = vrot.slane %v648, 4
        %v650 = vrot.slane %v582, 6
        %v651 = vsel %vm619, %v649, %v650
        %v652 = vrot.slane %v650, 4
        %v653 = vrot.slane %v583, 6
        %v654 = vsel %vm619, %v652, %v653
        %v655 = vrot.slane %v584, 6
        %v656 = vrot.slane %v655, 4
        %v657 = vrot.slane %v585, 6
        %v658 = vsel %vm619, %v656, %v657
        %v659 = vrot.slane %v657, 4
        %v660 = vrot.slane %v586, 6
        %v661 = vsel %vm619, %v659, %v660
        %v662 = vrot.slane %v587, 6
        %v663 = vrot.slane %v662, 4
        %v664 = vrot.slane %v588, 6
        %v665 = vsel %vm619, %v663, %v664
        %v666 = vrot.slane %v664, 4
        %v667 = vrot.slane %v589, 6
        %v668 = vsel %vm619, %v666, %v667
        %v669 = vrot.slane %v590, 6
        %v670 = vrot.slane %v669, 4
        %v671 = vrot.slane %v591, 6
        %v672 = vsel %vm619, %v670, %v671
        %v673 = vrot.slane %v671, 4
        %v674 = vrot.slane %v592, 6
        %v675 = vsel %vm619, %v673, %v674
        %s676 = scalar_lea.vmem %s1, 4
        %v677 = vld [vmem:[%s676] sm:$0x3]
        %v678 = vunpack.c.l.b16 %v623
        %v679 = vunpack.c.l.b16 %v626
        %v680 = vunpack.c.l.b16 %v630
        %v681 = vunpack.c.l.b16 %v633
        %v682 = vunpack.c.l.b16 %v637
        %v683 = vunpack.c.l.b16 %v640
        %v684 = vunpack.c.l.b16 %v644
        %v685 = vunpack.c.l.b16 %v647
        %v686 = vunpack.c.l.b16 %v651
        %v687 = vunpack.c.l.b16 %v654
        %v688 = vunpack.c.l.b16 %v658
        %v689 = vunpack.c.l.b16 %v661
        %v690 = vunpack.c.l.b16 %v665
        %v691 = vunpack.c.l.b16 %v668
        %v692 = vunpack.c.l.b16 %v672
        %v693 = vunpack.c.l.b16 %v675
        %v694 = vpack.c.b16 %v679, %v678
        %v695 = vpack.c.b16 %v681, %v680
        %v696 = vpack.c.b16 %v683, %v682
        %v697 = vpack.c.b16 %v685, %v684
        %v698 = vpack.c.b16 %v687, %v686
        %v699 = vpack.c.b16 %v689, %v688
        %v700 = vpack.c.b16 %v691, %v690
        %v701 = vpack.c.b16 %v693, %v692
        %v703 = vsel %vm218, %v694, 0
        %v706 = vsel %vm218, %v695, 0
        %v709 = vsel %vm218, %v696, 0
        %v712 = vsel %vm218, %v697, 0
        %v715 = vsel %vm218, %v698, 0
        %v718 = vsel %vm218, %v699, 0
        %v721 = vsel %vm218, %v700, 0
        %v724 = vsel %vm218, %v701, 0
        %v727 = vsel %vm243, %v677, 0
        %729 = vmatpush.bf16.msra.mxu0 0
        %730 = vmatpush.bf16.msra.mxu0 0
        %731 = vmatpush.bf16.msra.mxu0 0
        %732 = vmatpush.bf16.msra.mxu0 0
        %733 = vmatpush.bf16.msra.mxu0 0
        %734 = vmatpush.bf16.msra.mxu0 0
        %735 = vmatpush.bf16.msra.mxu0 0
        %736 = vmatpush.bf16.msra.mxu0 %v727
        %737 = vmatmul.bf16.gmra.mxu0 %v703
        %v738 = vpop.f32.mrf.mxu0
        %v739 = vadd.f32 0.0, %v738
        %v740 = vpop.f32.mrf.mxu0
        %v741 = vadd.f32 0.0, %v740
        %742 = vmatmul.bf16.gmra.mxu0 %v706
        %v743 = vpop.f32.mrf.mxu0
        %v744 = vadd.f32 0.0, %v743
        %v745 = vpop.f32.mrf.mxu0
        %v746 = vadd.f32 0.0, %v745
        %747 = vmatmul.bf16.gmra.mxu0 %v709
        %v748 = vpop.f32.mrf.mxu0
        %v749 = vadd.f32 0.0, %v748
        %v750 = vpop.f32.mrf.mxu0
        %v751 = vadd.f32 0.0, %v750
        %752 = vmatmul.bf16.gmra.mxu0 %v712
        %v753 = vpop.f32.mrf.mxu0
        %v754 = vadd.f32 0.0, %v753
        %v755 = vpop.f32.mrf.mxu0
        %v756 = vadd.f32 0.0, %v755
        %757 = vmatmul.bf16.gmra.mxu0 %v715
        %v758 = vpop.f32.mrf.mxu0
        %v759 = vadd.f32 0.0, %v758
        %v760 = vpop.f32.mrf.mxu0
        %v761 = vadd.f32 0.0, %v760
        %762 = vmatmul.bf16.gmra.mxu0 %v718
        %v763 = vpop.f32.mrf.mxu0
        %v764 = vadd.f32 0.0, %v763
        %v765 = vpop.f32.mrf.mxu0
        %v766 = vadd.f32 0.0, %v765
        %767 = vmatmul.bf16.gmra.mxu0 %v721
        %v768 = vpop.f32.mrf.mxu0
        %v769 = vadd.f32 0.0, %v768
        %v770 = vpop.f32.mrf.mxu0
        %v771 = vadd.f32 0.0, %v770
        %772 = vmatmul.bf16.gmra.mxu0 %v724
        %v773 = vpop.f32.mrf.mxu0
        %v774 = vadd.f32 0.0, %v773
        %v775 = vpop.f32.mrf.mxu0
        %v776 = vadd.f32 0.0, %v775
        %777 = vdwg.mxu0
        %v778 = vld [vmem:[#allocation2] sm:$0xff]
        %v779 = vld [vmem:[#allocation2 + $0x8] sm:$0xff]
        %v780 = vld [vmem:[#allocation2 + $0x10] sm:$0xff]
        %v781 = vld [vmem:[#allocation2 + $0x18] sm:$0xff]
        %v782 = vld [vmem:[#allocation2 + $0x20] sm:$0xff]
        %v783 = vld [vmem:[#allocation2 + $0x28] sm:$0xff]
        %v784 = vld [vmem:[#allocation2 + $0x30] sm:$0xff]
        %v785 = vld [vmem:[#allocation2 + $0x38] sm:$0xff]
        %v786 = vld [vmem:[#allocation2 + $0x40] sm:$0xff]
        %v787 = vld [vmem:[#allocation2 + $0x48] sm:$0xff]
        %v788 = vld [vmem:[#allocation2 + $0x50] sm:$0xff]
        %v789 = vld [vmem:[#allocation2 + $0x58] sm:$0xff]
        %v790 = vld [vmem:[#allocation2 + $0x60] sm:$0xff]
        %v791 = vld [vmem:[#allocation2 + $0x68] sm:$0xff]
        %v792 = vld [vmem:[#allocation2 + $0x70] sm:$0xff]
        %v793 = vld [vmem:[#allocation2 + $0x78] sm:$0xff]
        %v794 = vadd.f32 %v778, %v739
        %v795 = vadd.f32 %v779, %v741
        %v796 = vadd.f32 %v780, %v744
        %v797 = vadd.f32 %v781, %v746
        %v798 = vadd.f32 %v782, %v749
        %v799 = vadd.f32 %v783, %v751
        %v800 = vadd.f32 %v784, %v754
        %v801 = vadd.f32 %v785, %v756
        %v802 = vadd.f32 %v786, %v759
        %v803 = vadd.f32 %v787, %v761
        %v804 = vadd.f32 %v788, %v764
        %v805 = vadd.f32 %v789, %v766
        %v806 = vadd.f32 %v790, %v769
        %v807 = vadd.f32 %v791, %v771
        %v808 = vadd.f32 %v792, %v774
        %v809 = vadd.f32 %v793, %v776
        %810 = vst [vmem:[#allocation2] sm:$0xff] %v794
        %811 = vst [vmem:[#allocation2 + $0x8] sm:$0xff] %v795
        %812 = vst [vmem:[#allocation2 + $0x10] sm:$0xff] %v796
        %813 = vst [vmem:[#allocation2 + $0x18] sm:$0xff] %v797
        %814 = vst [vmem:[#allocation2 + $0x20] sm:$0xff] %v798
        %815 = vst [vmem:[#allocation2 + $0x28] sm:$0xff] %v799
        %816 = vst [vmem:[#allocation2 + $0x30] sm:$0xff] %v800
        %817 = vst [vmem:[#allocation2 + $0x38] sm:$0xff] %v801
        %818 = vst [vmem:[#allocation2 + $0x40] sm:$0xff] %v802
        %819 = vst [vmem:[#allocation2 + $0x48] sm:$0xff] %v803
        %820 = vst [vmem:[#allocation2 + $0x50] sm:$0xff] %v804
        %821 = vst [vmem:[#allocation2 + $0x58] sm:$0xff] %v805
        %822 = vst [vmem:[#allocation2 + $0x60] sm:$0xff] %v806
        %823 = vst [vmem:[#allocation2 + $0x68] sm:$0xff] %v807
        %824 = vst [vmem:[#allocation2 + $0x70] sm:$0xff] %v808
        %825 = vst [vmem:[#allocation2 + $0x78] sm:$0xff] %v809
        %s826 = sadd.s32 %s157, 2
        %s827 = smul.u32 %s826, 3
        %s828 = smul.addr %s827, 4
        %s829 = scalar_lea.vmem %s155, %s828
        %v830 = vld [vmem:[%s829] sm:$0xf]
        %v831 = vld [vmem:[%s829 + $0x4] sm:$0xf]
        %v832 = vld [vmem:[%s829 + $0xc] sm:$0xf]
        %v833 = vld [vmem:[%s829 + $0x10] sm:$0xf]
        %v834 = vld [vmem:[%s829 + $0x18] sm:$0xf]
        %v835 = vld [vmem:[%s829 + $0x1c] sm:$0xf]
        %v836 = vld [vmem:[%s829 + $0x24] sm:$0xf]
        %v837 = vld [vmem:[%s829 + $0x28] sm:$0xf]
        %v838 = vld [vmem:[%s829 + $0x30] sm:$0xf]
        %v839 = vld [vmem:[%s829 + $0x34] sm:$0xf]
        %v840 = vld [vmem:[%s829 + $0x3c] sm:$0xf]
        %v841 = vld [vmem:[%s829 + $0x40] sm:$0xf]
        %v842 = vld [vmem:[%s829 + $0x48] sm:$0xf]
        %v843 = vld [vmem:[%s829 + $0x4c] sm:$0xf]
        %v844 = vld [vmem:[%s829 + $0x54] sm:$0xf]
        %v845 = vld [vmem:[%s829 + $0x58] sm:$0xf]
        %s846 = scalar_lea.vmem %s1, 6
        %v847 = vld [vmem:[%s846] sm:$0x3]
        %v864 = vunpack.c.l.b16 %v830
        %v865 = vunpack.c.l.b16 %v831
        %v866 = vunpack.c.l.b16 %v832
        %v867 = vunpack.c.l.b16 %v833
        %v868 = vunpack.c.l.b16 %v834
        %v869 = vunpack.c.l.b16 %v835
        %v870 = vunpack.c.l.b16 %v836
        %v871 = vunpack.c.l.b16 %v837
        %v872 = vunpack.c.l.b16 %v838
        %v873 = vunpack.c.l.b16 %v839
        %v874 = vunpack.c.l.b16 %v840
        %v875 = vunpack.c.l.b16 %v841
        %v876 = vunpack.c.l.b16 %v842
        %v877 = vunpack.c.l.b16 %v843
        %v878 = vunpack.c.l.b16 %v844
        %v879 = vunpack.c.l.b16 %v845
        %v880 = vpack.c.b16 %v865, %v864
        %v881 = vpack.c.b16 %v867, %v866
        %v882 = vpack.c.b16 %v869, %v868
        %v883 = vpack.c.b16 %v871, %v870
        %v884 = vpack.c.b16 %v873, %v872
        %v885 = vpack.c.b16 %v875, %v874
        %v886 = vpack.c.b16 %v877, %v876
        %v887 = vpack.c.b16 %v879, %v878
        %v889 = vsel %vm218, %v880, 0
        %v892 = vsel %vm218, %v881, 0
        %v895 = vsel %vm218, %v882, 0
        %v898 = vsel %vm218, %v883, 0
        %v901 = vsel %vm218, %v884, 0
        %v904 = vsel %vm218, %v885, 0
        %v907 = vsel %vm218, %v886, 0
        %v910 = vsel %vm218, %v887, 0
        %v913 = vsel %vm243, %v847, 0
        %915 = vmatpush.bf16.msra.mxu0 0
        %916 = vmatpush.bf16.msra.mxu0 0
        %917 = vmatpush.bf16.msra.mxu0 0
        %918 = vmatpush.bf16.msra.mxu0 0
        %919 = vmatpush.bf16.msra.mxu0 0
        %920 = vmatpush.bf16.msra.mxu0 0
        %921 = vmatpush.bf16.msra.mxu0 0
        %922 = vmatpush.bf16.msra.mxu0 %v913
        %923 = vmatmul.bf16.gmra.mxu0 %v889
        %v924 = vpop.f32.mrf.mxu0
        %v925 = vadd.f32 0.0, %v924
        %v926 = vpop.f32.mrf.mxu0
        %v927 = vadd.f32 0.0, %v926
        %928 = vmatmul.bf16.gmra.mxu0 %v892
        %v929 = vpop.f32.mrf.mxu0
        %v930 = vadd.f32 0.0, %v929
        %v931 = vpop.f32.mrf.mxu0
        %v932 = vadd.f32 0.0, %v931
        %933 = vmatmul.bf16.gmra.mxu0 %v895
        %v934 = vpop.f32.mrf.mxu0
        %v935 = vadd.f32 0.0, %v934
        %v936 = vpop.f32.mrf.mxu0
        %v937 = vadd.f32 0.0, %v936
        %938 = vmatmul.bf16.gmra.mxu0 %v898
        %v939 = vpop.f32.mrf.mxu0
        %v940 = vadd.f32 0.0, %v939
        %v941 = vpop.f32.mrf.mxu0
        %v942 = vadd.f32 0.0, %v941
        %943 = vmatmul.bf16.gmra.mxu0 %v901
        %v944 = vpop.f32.mrf.mxu0
        %v945 = vadd.f32 0.0, %v944
        %v946 = vpop.f32.mrf.mxu0
        %v947 = vadd.f32 0.0, %v946
        %948 = vmatmul.bf16.gmra.mxu0 %v904
        %v949 = vpop.f32.mrf.mxu0
        %v950 = vadd.f32 0.0, %v949
        %v951 = vpop.f32.mrf.mxu0
        %v952 = vadd.f32 0.0, %v951
        %953 = vmatmul.bf16.gmra.mxu0 %v907
        %v954 = vpop.f32.mrf.mxu0
        %v955 = vadd.f32 0.0, %v954
        %v956 = vpop.f32.mrf.mxu0
        %v957 = vadd.f32 0.0, %v956
        %958 = vmatmul.bf16.gmra.mxu0 %v910
        %v959 = vpop.f32.mrf.mxu0
        %v960 = vadd.f32 0.0, %v959
        %v961 = vpop.f32.mrf.mxu0
        %v962 = vadd.f32 0.0, %v961
        %963 = vdwg.mxu0
        %v964 = vld [vmem:[#allocation2] sm:$0xff]
        %v965 = vld [vmem:[#allocation2 + $0x8] sm:$0xff]
        %v966 = vld [vmem:[#allocation2 + $0x10] sm:$0xff]
        %v967 = vld [vmem:[#allocation2 + $0x18] sm:$0xff]
        %v968 = vld [vmem:[#allocation2 + $0x20] sm:$0xff]
        %v969 = vld [vmem:[#allocation2 + $0x28] sm:$0xff]
        %v970 = vld [vmem:[#allocation2 + $0x30] sm:$0xff]
        %v971 = vld [vmem:[#allocation2 + $0x38] sm:$0xff]
        %v972 = vld [vmem:[#allocation2 + $0x40] sm:$0xff]
        %v973 = vld [vmem:[#allocation2 + $0x48] sm:$0xff]
        %v974 = vld [vmem:[#allocation2 + $0x50] sm:$0xff]
        %v975 = vld [vmem:[#allocation2 + $0x58] sm:$0xff]
        %v976 = vld [vmem:[#allocation2 + $0x60] sm:$0xff]
        %v977 = vld [vmem:[#allocation2 + $0x68] sm:$0xff]
        %v978 = vld [vmem:[#allocation2 + $0x70] sm:$0xff]
        %v979 = vld [vmem:[#allocation2 + $0x78] sm:$0xff]
        %v980 = vadd.f32 %v964, %v925
        %v981 = vadd.f32 %v965, %v927
        %v982 = vadd.f32 %v966, %v930
        %v983 = vadd.f32 %v967, %v932
        %v984 = vadd.f32 %v968, %v935
        %v985 = vadd.f32 %v969, %v937
        %v986 = vadd.f32 %v970, %v940
        %v987 = vadd.f32 %v971, %v942
        %v988 = vadd.f32 %v972, %v945
        %v989 = vadd.f32 %v973, %v947
        %v990 = vadd.f32 %v974, %v950
        %v991 = vadd.f32 %v975, %v952
        %v992 = vadd.f32 %v976, %v955
        %v993 = vadd.f32 %v977, %v957
        %v994 = vadd.f32 %v978, %v960
        %v995 = vadd.f32 %v979, %v962
        %996 = vst [vmem:[#allocation2] sm:$0xff] %v980
        %997 = vst [vmem:[#allocation2 + $0x8] sm:$0xff] %v981
        %998 = vst [vmem:[#allocation2 + $0x10] sm:$0xff] %v982
        %999 = vst [vmem:[#allocation2 + $0x18] sm:$0xff] %v983
        %1000 = vst [vmem:[#allocation2 + $0x20] sm:$0xff] %v984
        %1001 = vst [vmem:[#allocation2 + $0x28] sm:$0xff] %v985
        %1002 = vst [vmem:[#allocation2 + $0x30] sm:$0xff] %v986
        %1003 = vst [vmem:[#allocation2 + $0x38] sm:$0xff] %v987
        %1004 = vst [vmem:[#allocation2 + $0x40] sm:$0xff] %v988
        %1005 = vst [vmem:[#allocation2 + $0x48] sm:$0xff] %v989
        %1006 = vst [vmem:[#allocation2 + $0x50] sm:$0xff] %v990
        %1007 = vst [vmem:[#allocation2 + $0x58] sm:$0xff] %v991
        %1008 = vst [vmem:[#allocation2 + $0x60] sm:$0xff] %v992
        %1009 = vst [vmem:[#allocation2 + $0x68] sm:$0xff] %v993
        %1010 = vst [vmem:[#allocation2 + $0x70] sm:$0xff] %v994
        %1011 = vst [vmem:[#allocation2 + $0x78] sm:$0xff] %v995
        %v1012 = vld [vmem:[%s829] sm:$0xe]
        %v1013 = vld [vmem:[%s829 + $0x4] sm:$0xf]
        %v1014 = vld [vmem:[%s829 + $0x8] sm:$0x1]
        %v1015 = vld [vmem:[%s829 + $0xc] sm:$0xe]
        %v1016 = vld [vmem:[%s829 + $0x10] sm:$0xf]
        %v1017 = vld [vmem:[%s829 + $0x14] sm:$0x1]
        %v1018 = vld [vmem:[%s829 + $0x18] sm:$0xe]
        %v1019 = vld [vmem:[%s829 + $0x1c] sm:$0xf]
        %v1020 = vld [vmem:[%s829 + $0x20] sm:$0x1]
        %v1021 = vld [vmem:[%s829 + $0x24] sm:$0xe]
        %v1022 = vld [vmem:[%s829 + $0x28] sm:$0xf]
        %v1023 = vld [vmem:[%s829 + $0x2c] sm:$0x1]
        %v1024 = vld [vmem:[%s829 + $0x30] sm:$0xe]
        %v1025 = vld [vmem:[%s829 + $0x34] sm:$0xf]
        %v1026 = vld [vmem:[%s829 + $0x38] sm:$0x1]
        %v1027 = vld [vmem:[%s829 + $0x3c] sm:$0xe]
        %v1028 = vld [vmem:[%s829 + $0x40] sm:$0xf]
        %v1029 = vld [vmem:[%s829 + $0x44] sm:$0x1]
        %v1030 = vld [vmem:[%s829 + $0x48] sm:$0xe]
        %v1031 = vld [vmem:[%s829 + $0x4c] sm:$0xf]
        %v1032 = vld [vmem:[%s829 + $0x50] sm:$0x1]
        %v1033 = vld [vmem:[%s829 + $0x54] sm:$0xe]
        %v1034 = vld [vmem:[%s829 + $0x58] sm:$0xf]
        %v1035 = vld [vmem:[%s829 + $0x5c] sm:$0x1]
        %v1060 = vrot.slane %v1012, 5
        %v1061 = vrot.slane %v1060, 4
        %v1062 = vrot.slane %v1013, 5
        %v1063 = vsel %vm362, %v1061, %v1062
        %v1064 = vrot.slane %v1062, 4
        %v1065 = vrot.slane %v1014, 5
        %v1066 = vsel %vm362, %v1064, %v1065
        %v1067 = vrot.slane %v1015, 5
        %v1068 = vrot.slane %v1067, 4
        %v1069 = vrot.slane %v1016, 5
        %v1070 = vsel %vm362, %v1068, %v1069
        %v1071 = vrot.slane %v1069, 4
        %v1072 = vrot.slane %v1017, 5
        %v1073 = vsel %vm362, %v1071, %v1072
        %v1074 = vrot.slane %v1018, 5
        %v1075 = vrot.slane %v1074, 4
        %v1076 = vrot.slane %v1019, 5
        %v1077 = vsel %vm362, %v1075, %v1076
        %v1078 = vrot.slane %v1076, 4
        %v1079 = vrot.slane %v1020, 5
        %v1080 = vsel %vm362, %v1078, %v1079
        %v1081 = vrot.slane %v1021, 5
        %v1082 = vrot.slane %v1081, 4
        %v1083 = vrot.slane %v1022, 5
        %v1084 = vsel %vm362, %v1082, %v1083
        %v1085 = vrot.slane %v1083, 4
        %v1086 = vrot.slane %v1023, 5
        %v1087 = vsel %vm362, %v1085, %v1086
        %v1088 = vrot.slane %v1024, 5
        %v1089 = vrot.slane %v1088, 4
        %v1090 = vrot.slane %v1025, 5
        %v1091 = vsel %vm362, %v1089, %v1090
        %v1092 = vrot.slane %v1090, 4
        %v1093 = vrot.slane %v1026, 5
        %v1094 = vsel %vm362, %v1092, %v1093
        %v1095 = vrot.slane %v1027, 5
        %v1096 = vrot.slane %v1095, 4
        %v1097 = vrot.slane %v1028, 5
        %v1098 = vsel %vm362, %v1096, %v1097
        %v1099 = vrot.slane %v1097, 4
        %v1100 = vrot.slane %v1029, 5
        %v1101 = vsel %vm362, %v1099, %v1100
        %v1102 = vrot.slane %v1030, 5
        %v1103 = vrot.slane %v1102, 4
        %v1104 = vrot.slane %v1031, 5
        %v1105 = vsel %vm362, %v1103, %v1104
        %v1106 = vrot.slane %v1104, 4
        %v1107 = vrot.slane %v1032, 5
        %v1108 = vsel %vm362, %v1106, %v1107
        %v1109 = vrot.slane %v1033, 5
        %v1110 = vrot.slane %v1109, 4
        %v1111 = vrot.slane %v1034, 5
        %v1112 = vsel %vm362, %v1110, %v1111
        %v1113 = vrot.slane %v1111, 4
        %v1114 = vrot.slane %v1035, 5
        %v1115 = vsel %vm362, %v1113, %v1114
        %s1116 = scalar_lea.vmem %s1, 8
        %v1117 = vld [vmem:[%s1116] sm:$0x3]
        %v1118 = vunpack.c.l.b16 %v1063
        %v1119 = vunpack.c.l.b16 %v1066
        %v1120 = vunpack.c.l.b16 %v1070
        %v1121 = vunpack.c.l.b16 %v1073
        %v1122 = vunpack.c.l.b16 %v1077
        %v1123 = vunpack.c.l.b16 %v1080
        %v1124 = vunpack.c.l.b16 %v1084
        %v1125 = vunpack.c.l.b16 %v1087
        %v1126 = vunpack.c.l.b16 %v1091
        %v1127 = vunpack.c.l.b16 %v1094
        %v1128 = vunpack.c.l.b16 %v1098
        %v1129 = vunpack.c.l.b16 %v1101
        %v1130 = vunpack.c.l.b16 %v1105
        %v1131 = vunpack.c.l.b16 %v1108
        %v1132 = vunpack.c.l.b16 %v1112
        %v1133 = vunpack.c.l.b16 %v1115
        %v1134 = vpack.c.b16 %v1119, %v1118
        %v1135 = vpack.c.b16 %v1121, %v1120
        %v1136 = vpack.c.b16 %v1123, %v1122
        %v1137 = vpack.c.b16 %v1125, %v1124
        %v1138 = vpack.c.b16 %v1127, %v1126
        %v1139 = vpack.c.b16 %v1129, %v1128
        %v1140 = vpack.c.b16 %v1131, %v1130
        %v1141 = vpack.c.b16 %v1133, %v1132
        %v1143 = vsel %vm218, %v1134, 0
        %v1146 = vsel %vm218, %v1135, 0
        %v1149 = vsel %vm218, %v1136, 0
        %v1152 = vsel %vm218, %v1137, 0
        %v1155 = vsel %vm218, %v1138, 0
        %v1158 = vsel %vm218, %v1139, 0
        %v1161 = vsel %vm218, %v1140, 0
        %v1164 = vsel %vm218, %v1141, 0
        %v1167 = vsel %vm243, %v1117, 0
        %1169 = vmatpush.bf16.msra.mxu0 0
        %1170 = vmatpush.bf16.msra.mxu0 0
        %1171 = vmatpush.bf16.msra.mxu0 0
        %1172 = vmatpush.bf16.msra.mxu0 0
        %1173 = vmatpush.bf16.msra.mxu0 0
        %1174 = vmatpush.bf16.msra.mxu0 0
        %1175 = vmatpush.bf16.msra.mxu0 0
        %1176 = vmatpush.bf16.msra.mxu0 %v1167
        %1177 = vmatmul.bf16.gmra.mxu0 %v1143
        %v1178 = vpop.f32.mrf.mxu0
        %v1179 = vadd.f32 0.0, %v1178
        %v1180 = vpop.f32.mrf.mxu0
        %v1181 = vadd.f32 0.0, %v1180
        %1182 = vmatmul.bf16.gmra.mxu0 %v1146
        %v1183 = vpop.f32.mrf.mxu0
        %v1184 = vadd.f32 0.0, %v1183
        %v1185 = vpop.f32.mrf.mxu0
        %v1186 = vadd.f32 0.0, %v1185
        %1187 = vmatmul.bf16.gmra.mxu0 %v1149
        %v1188 = vpop.f32.mrf.mxu0
        %v1189 = vadd.f32 0.0, %v1188
        %v1190 = vpop.f32.mrf.mxu0
        %v1191 = vadd.f32 0.0, %v1190
        %1192 = vmatmul.bf16.gmra.mxu0 %v1152
        %v1193 = vpop.f32.mrf.mxu0
        %v1194 = vadd.f32 0.0, %v1193
        %v1195 = vpop.f32.mrf.mxu0
        %v1196 = vadd.f32 0.0, %v1195
        %1197 = vmatmul.bf16.gmra.mxu0 %v1155
        %v1198 = vpop.f32.mrf.mxu0
        %v1199 = vadd.f32 0.0, %v1198
        %v1200 = vpop.f32.mrf.mxu0
        %v1201 = vadd.f32 0.0, %v1200
        %1202 = vmatmul.bf16.gmra.mxu0 %v1158
        %v1203 = vpop.f32.mrf.mxu0
        %v1204 = vadd.f32 0.0, %v1203
        %v1205 = vpop.f32.mrf.mxu0
        %v1206 = vadd.f32 0.0, %v1205
        %1207 = vmatmul.bf16.gmra.mxu0 %v1161
        %v1208 = vpop.f32.mrf.mxu0
        %v1209 = vadd.f32 0.0, %v1208
        %v1210 = vpop.f32.mrf.mxu0
        %v1211 = vadd.f32 0.0, %v1210
        %1212 = vmatmul.bf16.gmra.mxu0 %v1164
        %v1213 = vpop.f32.mrf.mxu0
        %v1214 = vadd.f32 0.0, %v1213
        %v1215 = vpop.f32.mrf.mxu0
        %v1216 = vadd.f32 0.0, %v1215
        %1217 = vdwg.mxu0
        %v1218 = vld [vmem:[#allocation2] sm:$0xff]
        %v1219 = vld [vmem:[#allocation2 + $0x8] sm:$0xff]
        %v1220 = vld [vmem:[#allocation2 + $0x10] sm:$0xff]
        %v1221 = vld [vmem:[#allocation2 + $0x18] sm:$0xff]
        %v1222 = vld [vmem:[#allocation2 + $0x20] sm:$0xff]
        %v1223 = vld [vmem:[#allocation2 + $0x28] sm:$0xff]
        %v1224 = vld [vmem:[#allocation2 + $0x30] sm:$0xff]
        %v1225 = vld [vmem:[#allocation2 + $0x38] sm:$0xff]
        %v1226 = vld [vmem:[#allocation2 + $0x40] sm:$0xff]
        %v1227 = vld [vmem:[#allocation2 + $0x48] sm:$0xff]
        %v1228 = vld [vmem:[#allocation2 + $0x50] sm:$0xff]
        %v1229 = vld [vmem:[#allocation2 + $0x58] sm:$0xff]
        %v1230 = vld [vmem:[#allocation2 + $0x60] sm:$0xff]
        %v1231 = vld [vmem:[#allocation2 + $0x68] sm:$0xff]
        %v1232 = vld [vmem:[#allocation2 + $0x70] sm:$0xff]
        %v1233 = vld [vmem:[#allocation2 + $0x78] sm:$0xff]
        %v1234 = vadd.f32 %v1218, %v1179
        %v1235 = vadd.f32 %v1219, %v1181
        %v1236 = vadd.f32 %v1220, %v1184
        %v1237 = vadd.f32 %v1221, %v1186
        %v1238 = vadd.f32 %v1222, %v1189
        %v1239 = vadd.f32 %v1223, %v1191
        %v1240 = vadd.f32 %v1224, %v1194
        %v1241 = vadd.f32 %v1225, %v1196
        %v1242 = vadd.f32 %v1226, %v1199
        %v1243 = vadd.f32 %v1227, %v1201
        %v1244 = vadd.f32 %v1228, %v1204
        %v1245 = vadd.f32 %v1229, %v1206
        %v1246 = vadd.f32 %v1230, %v1209
        %v1247 = vadd.f32 %v1231, %v1211
        %v1248 = vadd.f32 %v1232, %v1214
        %v1249 = vadd.f32 %v1233, %v1216
        %1250 = vst [vmem:[#allocation2] sm:$0xff] %v1234
        %1251 = vst [vmem:[#allocation2 + $0x8] sm:$0xff] %v1235
        %1252 = vst [vmem:[#allocation2 + $0x10] sm:$0xff] %v1236
        %1253 = vst [vmem:[#allocation2 + $0x18] sm:$0xff] %v1237
        %1254 = vst [vmem:[#allocation2 + $0x20] sm:$0xff] %v1238
        %1255 = vst [vmem:[#allocation2 + $0x28] sm:$0xff] %v1239
        %1256 = vst [vmem:[#allocation2 + $0x30] sm:$0xff] %v1240
        %1257 = vst [vmem:[#allocation2 + $0x38] sm:$0xff] %v1241
        %1258 = vst [vmem:[#allocation2 + $0x40] sm:$0xff] %v1242
        %1259 = vst [vmem:[#allocation2 + $0x48] sm:$0xff] %v1243
        %1260 = vst [vmem:[#allocation2 + $0x50] sm:$0xff] %v1244
        %1261 = vst [vmem:[#allocation2 + $0x58] sm:$0xff] %v1245
        %1262 = vst [vmem:[#allocation2 + $0x60] sm:$0xff] %v1246
        %1263 = vst [vmem:[#allocation2 + $0x68] sm:$0xff] %v1247
        %1264 = vst [vmem:[#allocation2 + $0x70] sm:$0xff] %v1248
        %1265 = vst [vmem:[#allocation2 + $0x78] sm:$0xff] %v1249
        %v1266 = vld [vmem:[%s829] sm:$0xc]
        %v1267 = vld [vmem:[%s829 + $0x4] sm:$0xf]
        %v1268 = vld [vmem:[%s829 + $0x8] sm:$0x3]
        %v1269 = vld [vmem:[%s829 + $0xc] sm:$0xc]
        %v1270 = vld [vmem:[%s829 + $0x10] sm:$0xf]
        %v1271 = vld [vmem:[%s829 + $0x14] sm:$0x3]
        %v1272 = vld [vmem:[%s829 + $0x18] sm:$0xc]
        %v1273 = vld [vmem:[%s829 + $0x1c] sm:$0xf]
        %v1274 = vld [vmem:[%s829 + $0x20] sm:$0x3]
        %v1275 = vld [vmem:[%s829 + $0x24] sm:$0xc]
        %v1276 = vld [vmem:[%s829 + $0x28] sm:$0xf]
        %v1277 = vld [vmem:[%s829 + $0x2c] sm:$0x3]
        %v1278 = vld [vmem:[%s829 + $0x30] sm:$0xc]
        %v1279 = vld [vmem:[%s829 + $0x34] sm:$0xf]
        %v1280 = vld [vmem:[%s829 + $0x38] sm:$0x3]
        %v1281 = vld [vmem:[%s829 + $0x3c] sm:$0xc]
        %v1282 = vld [vmem:[%s829 + $0x40] sm:$0xf]
        %v1283 = vld [vmem:[%s829 + $0x44] sm:$0x3]
        %v1284 = vld [vmem:[%s829 + $0x48] sm:$0xc]
        %v1285 = vld [vmem:[%s829 + $0x4c] sm:$0xf]
        %v1286 = vld [vmem:[%s829 + $0x50] sm:$0x3]
        %v1287 = vld [vmem:[%s829 + $0x54] sm:$0xc]
        %v1288 = vld [vmem:[%s829 + $0x58] sm:$0xf]
        %v1289 = vld [vmem:[%s829 + $0x5c] sm:$0x3]
        %v1314 = vrot.slane %v1266, 6
        %v1315 = vrot.slane %v1314, 4
        %v1316 = vrot.slane %v1267, 6
        %v1317 = vsel %vm619, %v1315, %v1316
        %v1318 = vrot.slane %v1316, 4
        %v1319 = vrot.slane %v1268, 6
        %v1320 = vsel %vm619, %v1318, %v1319
        %v1321 = vrot.slane %v1269, 6
        %v1322 = vrot.slane %v1321, 4
        %v1323 = vrot.slane %v1270, 6
        %v1324 = vsel %vm619, %v1322, %v1323
        %v1325 = vrot.slane %v1323, 4
        %v1326 = vrot.slane %v1271, 6
        %v1327 = vsel %vm619, %v1325, %v1326
        %v1328 = vrot.slane %v1272, 6
        %v1329 = vrot.slane %v1328, 4
        %v1330 = vrot.slane %v1273, 6
        %v1331 = vsel %vm619, %v1329, %v1330
        %v1332 = vrot.slane %v1330, 4
        %v1333 = vrot.slane %v1274, 6
        %v1334 = vsel %vm619, %v1332, %v1333
        %v1335 = vrot.slane %v1275, 6
        %v1336 = vrot.slane %v1335, 4
        %v1337 = vrot.slane %v1276, 6
        %v1338 = vsel %vm619, %v1336, %v1337
        %v1339 = vrot.slane %v1337, 4
        %v1340 = vrot.slane %v1277, 6
        %v1341 = vsel %vm619, %v1339, %v1340
        %v1342 = vrot.slane %v1278, 6
        %v1343 = vrot.slane %v1342, 4
        %v1344 = vrot.slane %v1279, 6
        %v1345 = vsel %vm619, %v1343, %v1344
        %v1346 = vrot.slane %v1344, 4
        %v1347 = vrot.slane %v1280, 6
        %v1348 = vsel %vm619, %v1346, %v1347
        %v1349 = vrot.slane %v1281, 6
        %v1350 = vrot.slane %v1349, 4
        %v1351 = vrot.slane %v1282, 6
        %v1352 = vsel %vm619, %v1350, %v1351
        %v1353 = vrot.slane %v1351, 4
        %v1354 = vrot.slane %v1283, 6
        %v1355 = vsel %vm619, %v1353, %v1354
        %v1356 = vrot.slane %v1284, 6
        %v1357 = vrot.slane %v1356, 4
        %v1358 = vrot.slane %v1285, 6
        %v1359 = vsel %vm619, %v1357, %v1358
        %v1360 = vrot.slane %v1358, 4
        %v1361 = vrot.slane %v1286, 6
        %v1362 = vsel %vm619, %v1360, %v1361
        %v1363 = vrot.slane %v1287, 6
        %v1364 = vrot.slane %v1363, 4
        %v1365 = vrot.slane %v1288, 6
        %v1366 = vsel %vm619, %v1364, %v1365
        %v1367 = vrot.slane %v1365, 4
        %v1368 = vrot.slane %v1289, 6
        %v1369 = vsel %vm619, %v1367, %v1368
        %s1370 = scalar_lea.vmem %s1, 10
        %v1371 = vld [vmem:[%s1370] sm:$0x3]
        %v1372 = vunpack.c.l.b16 %v1317
        %v1373 = vunpack.c.l.b16 %v1320
        %v1374 = vunpack.c.l.b16 %v1324
        %v1375 = vunpack.c.l.b16 %v1327
        %v1376 = vunpack.c.l.b16 %v1331
        %v1377 = vunpack.c.l.b16 %v1334
        %v1378 = vunpack.c.l.b16 %v1338
        %v1379 = vunpack.c.l.b16 %v1341
        %v1380 = vunpack.c.l.b16 %v1345
        %v1381 = vunpack.c.l.b16 %v1348
        %v1382 = vunpack.c.l.b16 %v1352
        %v1383 = vunpack.c.l.b16 %v1355
        %v1384 = vunpack.c.l.b16 %v1359
        %v1385 = vunpack.c.l.b16 %v1362
        %v1386 = vunpack.c.l.b16 %v1366
        %v1387 = vunpack.c.l.b16 %v1369
        %v1388 = vpack.c.b16 %v1373, %v1372
        %v1389 = vpack.c.b16 %v1375, %v1374
        %v1390 = vpack.c.b16 %v1377, %v1376
        %v1391 = vpack.c.b16 %v1379, %v1378
        %v1392 = vpack.c.b16 %v1381, %v1380
        %v1393 = vpack.c.b16 %v1383, %v1382
        %v1394 = vpack.c.b16 %v1385, %v1384
        %v1395 = vpack.c.b16 %v1387, %v1386
        %v1397 = vsel %vm218, %v1388, 0
        %v1400 = vsel %vm218, %v1389, 0
        %v1403 = vsel %vm218, %v1390, 0
        %v1406 = vsel %vm218, %v1391, 0
        %v1409 = vsel %vm218, %v1392, 0
        %v1412 = vsel %vm218, %v1393, 0
        %v1415 = vsel %vm218, %v1394, 0
        %v1418 = vsel %vm218, %v1395, 0
        %v1421 = vsel %vm243, %v1371, 0
        %1423 = vmatpush.bf16.msra.mxu0 0
        %1424 = vmatpush.bf16.msra.mxu0 0
        %1425 = vmatpush.bf16.msra.mxu0 0
        %1426 = vmatpush.bf16.msra.mxu0 0
        %1427 = vmatpush.bf16.msra.mxu0 0
        %1428 = vmatpush.bf16.msra.mxu0 0
        %1429 = vmatpush.bf16.msra.mxu0 0
        %1430 = vmatpush.bf16.msra.mxu0 %v1421
        %1431 = vmatmul.bf16.gmra.mxu0 %v1397
        %v1432 = vpop.f32.mrf.mxu0
        %v1433 = vadd.f32 0.0, %v1432
        %v1434 = vpop.f32.mrf.mxu0
        %v1435 = vadd.f32 0.0, %v1434
        %1436 = vmatmul.bf16.gmra.mxu0 %v1400
        %v1437 = vpop.f32.mrf.mxu0
        %v1438 = vadd.f32 0.0, %v1437
        %v1439 = vpop.f32.mrf.mxu0
        %v1440 = vadd.f32 0.0, %v1439
        %1441 = vmatmul.bf16.gmra.mxu0 %v1403
        %v1442 = vpop.f32.mrf.mxu0
        %v1443 = vadd.f32 0.0, %v1442
        %v1444 = vpop.f32.mrf.mxu0
        %v1445 = vadd.f32 0.0, %v1444
        %1446 = vmatmul.bf16.gmra.mxu0 %v1406
        %v1447 = vpop.f32.mrf.mxu0
        %v1448 = vadd.f32 0.0, %v1447
        %v1449 = vpop.f32.mrf.mxu0
        %v1450 = vadd.f32 0.0, %v1449
        %1451 = vmatmul.bf16.gmra.mxu0 %v1409
        %v1452 = vpop.f32.mrf.mxu0
        %v1453 = vadd.f32 0.0, %v1452
        %v1454 = vpop.f32.mrf.mxu0
        %v1455 = vadd.f32 0.0, %v1454
        %1456 = vmatmul.bf16.gmra.mxu0 %v1412
        %v1457 = vpop.f32.mrf.mxu0
        %v1458 = vadd.f32 0.0, %v1457
        %v1459 = vpop.f32.mrf.mxu0
        %v1460 = vadd.f32 0.0, %v1459
        %1461 = vmatmul.bf16.gmra.mxu0 %v1415
        %v1462 = vpop.f32.mrf.mxu0
        %v1463 = vadd.f32 0.0, %v1462
        %v1464 = vpop.f32.mrf.mxu0
        %v1465 = vadd.f32 0.0, %v1464
        %1466 = vmatmul.bf16.gmra.mxu0 %v1418
        %v1467 = vpop.f32.mrf.mxu0
        %v1468 = vadd.f32 0.0, %v1467
        %v1469 = vpop.f32.mrf.mxu0
        %v1470 = vadd.f32 0.0, %v1469
        %1471 = vdwg.mxu0
        %v1472 = vld [vmem:[#allocation2] sm:$0xff]
        %v1473 = vld [vmem:[#allocation2 + $0x8] sm:$0xff]
        %v1474 = vld [vmem:[#allocation2 + $0x10] sm:$0xff]
        %v1475 = vld [vmem:[#allocation2 + $0x18] sm:$0xff]
        %v1476 = vld [vmem:[#allocation2 + $0x20] sm:$0xff]
        %v1477 = vld [vmem:[#allocation2 + $0x28] sm:$0xff]
        %v1478 = vld [vmem:[#allocation2 + $0x30] sm:$0xff]
        %v1479 = vld [vmem:[#allocation2 + $0x38] sm:$0xff]
        %v1480 = vld [vmem:[#allocation2 + $0x40] sm:$0xff]
        %v1481 = vld [vmem:[#allocation2 + $0x48] sm:$0xff]
        %v1482 = vld [vmem:[#allocation2 + $0x50] sm:$0xff]
        %v1483 = vld [vmem:[#allocation2 + $0x58] sm:$0xff]
        %v1484 = vld [vmem:[#allocation2 + $0x60] sm:$0xff]
        %v1485 = vld [vmem:[#allocation2 + $0x68] sm:$0xff]
        %v1486 = vld [vmem:[#allocation2 + $0x70] sm:$0xff]
        %v1487 = vld [vmem:[#allocation2 + $0x78] sm:$0xff]
        %v1488 = vadd.f32 %v1472, %v1433
        %v1489 = vadd.f32 %v1473, %v1435
        %v1490 = vadd.f32 %v1474, %v1438
        %v1491 = vadd.f32 %v1475, %v1440
        %v1492 = vadd.f32 %v1476, %v1443
        %v1493 = vadd.f32 %v1477, %v1445
        %v1494 = vadd.f32 %v1478, %v1448
        %v1495 = vadd.f32 %v1479, %v1450
        %v1496 = vadd.f32 %v1480, %v1453
        %v1497 = vadd.f32 %v1481, %v1455
        %v1498 = vadd.f32 %v1482, %v1458
        %v1499 = vadd.f32 %v1483, %v1460
        %v1500 = vadd.f32 %v1484, %v1463
        %v1501 = vadd.f32 %v1485, %v1465
        %v1502 = vadd.f32 %v1486, %v1468
        %v1503 = vadd.f32 %v1487, %v1470
        %1504 = vst [vmem:[#allocation2] sm:$0xff] %v1488
        %1505 = vst [vmem:[#allocation2 + $0x8] sm:$0xff] %v1489
        %1506 = vst [vmem:[#allocation2 + $0x10] sm:$0xff] %v1490
        %1507 = vst [vmem:[#allocation2 + $0x18] sm:$0xff] %v1491
        %1508 = vst [vmem:[#allocation2 + $0x20] sm:$0xff] %v1492
        %1509 = vst [vmem:[#allocation2 + $0x28] sm:$0xff] %v1493
        %1510 = vst [vmem:[#allocation2 + $0x30] sm:$0xff] %v1494
        %1511 = vst [vmem:[#allocation2 + $0x38] sm:$0xff] %v1495
        %1512 = vst [vmem:[#allocation2 + $0x40] sm:$0xff] %v1496
        %1513 = vst [vmem:[#allocation2 + $0x48] sm:$0xff] %v1497
        %1514 = vst [vmem:[#allocation2 + $0x50] sm:$0xff] %v1498
        %1515 = vst [vmem:[#allocation2 + $0x58] sm:$0xff] %v1499
        %1516 = vst [vmem:[#allocation2 + $0x60] sm:$0xff] %v1500
        %1517 = vst [vmem:[#allocation2 + $0x68] sm:$0xff] %v1501
        %1518 = vst [vmem:[#allocation2 + $0x70] sm:$0xff] %v1502
        %1519 = vst [vmem:[#allocation2 + $0x78] sm:$0xff] %v1503
        %s1520 = sadd.s32 %s157, 4
        %s1521 = smul.u32 %s1520, 3
        %s1522 = smul.addr %s1521, 4
        %s1523 = scalar_lea.vmem %s155, %s1522
        %v1524 = vld [vmem:[%s1523] sm:$0xf]
        %v1525 = vld [vmem:[%s1523 + $0x4] sm:$0xf]
        %v1526 = vld [vmem:[%s1523 + $0xc] sm:$0xf]
        %v1527 = vld [vmem:[%s1523 + $0x10] sm:$0xf]
        %v1528 = vld [vmem:[%s1523 + $0x18] sm:$0xf]
        %v1529 = vld [vmem:[%s1523 + $0x1c] sm:$0xf]
        %v1530 = vld [vmem:[%s1523 + $0x24] sm:$0xf]
        %v1531 = vld [vmem:[%s1523 + $0x28] sm:$0xf]
        %v1532 = vld [vmem:[%s1523 + $0x30] sm:$0xf]
        %v1533 = vld [vmem:[%s1523 + $0x34] sm:$0xf]
        %v1534 = vld [vmem:[%s1523 + $0x3c] sm:$0xf]
        %v1535 = vld [vmem:[%s1523 + $0x40] sm:$0xf]
        %v1536 = vld [vmem:[%s1523 + $0x48] sm:$0xf]
        %v1537 = vld [vmem:[%s1523 + $0x4c] sm:$0xf]
        %v1538 = vld [vmem:[%s1523 + $0x54] sm:$0xf]
        %v1539 = vld [vmem:[%s1523 + $0x58] sm:$0xf]
        %s1540 = scalar_lea.vmem %s1, 12
        %v1541 = vld [vmem:[%s1540] sm:$0x3]
        %v1558 = vunpack.c.l.b16 %v1524
        %v1559 = vunpack.c.l.b16 %v1525
        %v1560 = vunpack.c.l.b16 %v1526
        %v1561 = vunpack.c.l.b16 %v1527
        %v1562 = vunpack.c.l.b16 %v1528
        %v1563 = vunpack.c.l.b16 %v1529
        %v1564 = vunpack.c.l.b16 %v1530
        %v1565 = vunpack.c.l.b16 %v1531
        %v1566 = vunpack.c.l.b16 %v1532
        %v1567 = vunpack.c.l.b16 %v1533
        %v1568 = vunpack.c.l.b16 %v1534
        %v1569 = vunpack.c.l.b16 %v1535
        %v1570 = vunpack.c.l.b16 %v1536
        %v1571 = vunpack.c.l.b16 %v1537
        %v1572 = vunpack.c.l.b16 %v1538
        %v1573 = vunpack.c.l.b16 %v1539
        %v1574 = vpack.c.b16 %v1559, %v1558
        %v1575 = vpack.c.b16 %v1561, %v1560
        %v1576 = vpack.c.b16 %v1563, %v1562
        %v1577 = vpack.c.b16 %v1565, %v1564
        %v1578 = vpack.c.b16 %v1567, %v1566
        %v1579 = vpack.c.b16 %v1569, %v1568
        %v1580 = vpack.c.b16 %v1571, %v1570
        %v1581 = vpack.c.b16 %v1573, %v1572
        %v1583 = vsel %vm218, %v1574, 0
        %v1586 = vsel %vm218, %v1575, 0
        %v1589 = vsel %vm218, %v1576, 0
        %v1592 = vsel %vm218, %v1577, 0
        %v1595 = vsel %vm218, %v1578, 0
        %v1598 = vsel %vm218, %v1579, 0
        %v1601 = vsel %vm218, %v1580, 0
        %v1604 = vsel %vm218, %v1581, 0
        %v1607 = vsel %vm243, %v1541, 0
        %1609 = vmatpush.bf16.msra.mxu0 0
        %1610 = vmatpush.bf16.msra.mxu0 0
        %1611 = vmatpush.bf16.msra.mxu0 0
        %1612 = vmatpush.bf16.msra.mxu0 0
        %1613 = vmatpush.bf16.msra.mxu0 0
        %1614 = vmatpush.bf16.msra.mxu0 0
        %1615 = vmatpush.bf16.msra.mxu0 0
        %1616 = vmatpush.bf16.msra.mxu0 %v1607
        %1617 = vmatmul.bf16.gmra.mxu0 %v1583
        %v1618 = vpop.f32.mrf.mxu0
        %v1619 = vadd.f32 0.0, %v1618
        %v1620 = vpop.f32.mrf.mxu0
        %v1621 = vadd.f32 0.0, %v1620
        %1622 = vmatmul.bf16.gmra.mxu0 %v1586
        %v1623 = vpop.f32.mrf.mxu0
        %v1624 = vadd.f32 0.0, %v1623
        %v1625 = vpop.f32.mrf.mxu0
        %v1626 = vadd.f32 0.0, %v1625
        %1627 = vmatmul.bf16.gmra.mxu0 %v1589
        %v1628 = vpop.f32.mrf.mxu0
        %v1629 = vadd.f32 0.0, %v1628
        %v1630 = vpop.f32.mrf.mxu0
        %v1631 = vadd.f32 0.0, %v1630
        %1632 = vmatmul.bf16.gmra.mxu0 %v1592
        %v1633 = vpop.f32.mrf.mxu0
        %v1634 = vadd.f32 0.0, %v1633
        %v1635 = vpop.f32.mrf.mxu0
        %v1636 = vadd.f32 0.0, %v1635
        %1637 = vmatmul.bf16.gmra.mxu0 %v1595
        %v1638 = vpop.f32.mrf.mxu0
        %v1639 = vadd.f32 0.0, %v1638
        %v1640 = vpop.f32.mrf.mxu0
        %v1641 = vadd.f32 0.0, %v1640
        %1642 = vmatmul.bf16.gmra.mxu0 %v1598
        %v1643 = vpop.f32.mrf.mxu0
        %v1644 = vadd.f32 0.0, %v1643
        %v1645 = vpop.f32.mrf.mxu0
        %v1646 = vadd.f32 0.0, %v1645
        %1647 = vmatmul.bf16.gmra.mxu0 %v1601
        %v1648 = vpop.f32.mrf.mxu0
        %v1649 = vadd.f32 0.0, %v1648
        %v1650 = vpop.f32.mrf.mxu0
        %v1651 = vadd.f32 0.0, %v1650
        %1652 = vmatmul.bf16.gmra.mxu0 %v1604
        %v1653 = vpop.f32.mrf.mxu0
        %v1654 = vadd.f32 0.0, %v1653
        %v1655 = vpop.f32.mrf.mxu0
        %v1656 = vadd.f32 0.0, %v1655
        %1657 = vdwg.mxu0
        %v1658 = vld [vmem:[#allocation2] sm:$0xff]
        %v1659 = vld [vmem:[#allocation2 + $0x8] sm:$0xff]
        %v1660 = vld [vmem:[#allocation2 + $0x10] sm:$0xff]
        %v1661 = vld [vmem:[#allocation2 + $0x18] sm:$0xff]
        %v1662 = vld [vmem:[#allocation2 + $0x20] sm:$0xff]
        %v1663 = vld [vmem:[#allocation2 + $0x28] sm:$0xff]
        %v1664 = vld [vmem:[#allocation2 + $0x30] sm:$0xff]
        %v1665 = vld [vmem:[#allocation2 + $0x38] sm:$0xff]
        %v1666 = vld [vmem:[#allocation2 + $0x40] sm:$0xff]
        %v1667 = vld [vmem:[#allocation2 + $0x48] sm:$0xff]
        %v1668 = vld [vmem:[#allocation2 + $0x50] sm:$0xff]
        %v1669 = vld [vmem:[#allocation2 + $0x58] sm:$0xff]
        %v1670 = vld [vmem:[#allocation2 + $0x60] sm:$0xff]
        %v1671 = vld [vmem:[#allocation2 + $0x68] sm:$0xff]
        %v1672 = vld [vmem:[#allocation2 + $0x70] sm:$0xff]
        %v1673 = vld [vmem:[#allocation2 + $0x78] sm:$0xff]
        %v1674 = vadd.f32 %v1658, %v1619
        %v1675 = vadd.f32 %v1659, %v1621
        %v1676 = vadd.f32 %v1660, %v1624
        %v1677 = vadd.f32 %v1661, %v1626
        %v1678 = vadd.f32 %v1662, %v1629
        %v1679 = vadd.f32 %v1663, %v1631
        %v1680 = vadd.f32 %v1664, %v1634
        %v1681 = vadd.f32 %v1665, %v1636
        %v1682 = vadd.f32 %v1666, %v1639
        %v1683 = vadd.f32 %v1667, %v1641
        %v1684 = vadd.f32 %v1668, %v1644
        %v1685 = vadd.f32 %v1669, %v1646
        %v1686 = vadd.f32 %v1670, %v1649
        %v1687 = vadd.f32 %v1671, %v1651
        %v1688 = vadd.f32 %v1672, %v1654
        %v1689 = vadd.f32 %v1673, %v1656
        %1690 = vst [vmem:[#allocation2] sm:$0xff] %v1674
        %1691 = vst [vmem:[#allocation2 + $0x8] sm:$0xff] %v1675
        %1692 = vst [vmem:[#allocation2 + $0x10] sm:$0xff] %v1676
        %1693 = vst [vmem:[#allocation2 + $0x18] sm:$0xff] %v1677
        %1694 = vst [vmem:[#allocation2 + $0x20] sm:$0xff] %v1678
        %1695 = vst [vmem:[#allocation2 + $0x28] sm:$0xff] %v1679
        %1696 = vst [vmem:[#allocation2 + $0x30] sm:$0xff] %v1680
        %1697 = vst [vmem:[#allocation2 + $0x38] sm:$0xff] %v1681
        %1698 = vst [vmem:[#allocation2 + $0x40] sm:$0xff] %v1682
        %1699 = vst [vmem:[#allocation2 + $0x48] sm:$0xff] %v1683
        %1700 = vst [vmem:[#allocation2 + $0x50] sm:$0xff] %v1684
        %1701 = vst [vmem:[#allocation2 + $0x58] sm:$0xff] %v1685
        %1702 = vst [vmem:[#allocation2 + $0x60] sm:$0xff] %v1686
        %1703 = vst [vmem:[#allocation2 + $0x68] sm:$0xff] %v1687
        %1704 = vst [vmem:[#allocation2 + $0x70] sm:$0xff] %v1688
        %1705 = vst [vmem:[#allocation2 + $0x78] sm:$0xff] %v1689
        %v1706 = vld [vmem:[%s1523] sm:$0xe]
        %v1707 = vld [vmem:[%s1523 + $0x4] sm:$0xf]
        %v1708 = vld [vmem:[%s1523 + $0x8] sm:$0x1]
        %v1709 = vld [vmem:[%s1523 + $0xc] sm:$0xe]
        %v1710 = vld [vmem:[%s1523 + $0x10] sm:$0xf]
        %v1711 = vld [vmem:[%s1523 + $0x14] sm:$0x1]
        %v1712 = vld [vmem:[%s1523 + $0x18] sm:$0xe]
        %v1713 = vld [vmem:[%s1523 + $0x1c] sm:$0xf]
        %v1714 = vld [vmem:[%s1523 + $0x20] sm:$0x1]
        %v1715 = vld [vmem:[%s1523 + $0x24] sm:$0xe]
        %v1716 = vld [vmem:[%s1523 + $0x28] sm:$0xf]
        %v1717 = vld [vmem:[%s1523 + $0x2c] sm:$0x1]
        %v1718 = vld [vmem:[%s1523 + $0x30] sm:$0xe]
        %v1719 = vld [vmem:[%s1523 + $0x34] sm:$0xf]
        %v1720 = vld [vmem:[%s1523 + $0x38] sm:$0x1]
        %v1721 = vld [vmem:[%s1523 + $0x3c] sm:$0xe]
        %v1722 = vld [vmem:[%s1523 + $0x40] sm:$0xf]
        %v1723 = vld [vmem:[%s1523 + $0x44] sm:$0x1]
        %v1724 = vld [vmem:[%s1523 + $0x48] sm:$0xe]
        %v1725 = vld [vmem:[%s1523 + $0x4c] sm:$0xf]
        %v1726 = vld [vmem:[%s1523 + $0x50] sm:$0x1]
        %v1727 = vld [vmem:[%s1523 + $0x54] sm:$0xe]
        %v1728 = vld [vmem:[%s1523 + $0x58] sm:$0xf]
        %v1729 = vld [vmem:[%s1523 + $0x5c] sm:$0x1]
        %v1754 = vrot.slane %v1706, 5
        %v1755 = vrot.slane %v1754, 4
        %v1756 = vrot.slane %v1707, 5
        %v1757 = vsel %vm362, %v1755, %v1756
        %v1758 = vrot.slane %v1756, 4
        %v1759 = vrot.slane %v1708, 5
        %v1760 = vsel %vm362, %v1758, %v1759
        %v1761 = vrot.slane %v1709, 5
        %v1762 = vrot.slane %v1761, 4
        %v1763 = vrot.slane %v1710, 5
        %v1764 = vsel %vm362, %v1762, %v1763
        %v1765 = vrot.slane %v1763, 4
        %v1766 = vrot.slane %v1711, 5
        %v1767 = vsel %vm362, %v1765, %v1766
        %v1768 = vrot.slane %v1712, 5
        %v1769 = vrot.slane %v1768, 4
        %v1770 = vrot.slane %v1713, 5
        %v1771 = vsel %vm362, %v1769, %v1770
        %v1772 = vrot.slane %v1770, 4
        %v1773 = vrot.slane %v1714, 5
        %v1774 = vsel %vm362, %v1772, %v1773
        %v1775 = vrot.slane %v1715, 5
        %v1776 = vrot.slane %v1775, 4
        %v1777 = vrot.slane %v1716, 5
        %v1778 = vsel %vm362, %v1776, %v1777
        %v1779 = vrot.slane %v1777, 4
        %v1780 = vrot.slane %v1717, 5
        %v1781 = vsel %vm362, %v1779, %v1780
        %v1782 = vrot.slane %v1718, 5
        %v1783 = vrot.slane %v1782, 4
        %v1784 = vrot.slane %v1719, 5
        %v1785 = vsel %vm362, %v1783, %v1784
        %v1786 = vrot.slane %v1784, 4
        %v1787 = vrot.slane %v1720, 5
        %v1788 = vsel %vm362, %v1786, %v1787
        %v1789 = vrot.slane %v1721, 5
        %v1790 = vrot.slane %v1789, 4
        %v1791 = vrot.slane %v1722, 5
        %v1792 = vsel %vm362, %v1790, %v1791
        %v1793 = vrot.slane %v1791, 4
        %v1794 = vrot.slane %v1723, 5
        %v1795 = vsel %vm362, %v1793, %v1794
        %v1796 = vrot.slane %v1724, 5
        %v1797 = vrot.slane %v1796, 4
        %v1798 = vrot.slane %v1725, 5
        %v1799 = vsel %vm362, %v1797, %v1798
        %v1800 = vrot.slane %v1798, 4
        %v1801 = vrot.slane %v1726, 5
        %v1802 = vsel %vm362, %v1800, %v1801
        %v1803 = vrot.slane %v1727, 5
        %v1804 = vrot.slane %v1803, 4
        %v1805 = vrot.slane %v1728, 5
        %v1806 = vsel %vm362, %v1804, %v1805
        %v1807 = vrot.slane %v1805, 4
        %v1808 = vrot.slane %v1729, 5
        %v1809 = vsel %vm362, %v1807, %v1808
        %s1810 = scalar_lea.vmem %s1, 14
        %v1811 = vld [vmem:[%s1810] sm:$0x3]
        %v1812 = vunpack.c.l.b16 %v1757
        %v1813 = vunpack.c.l.b16 %v1760
        %v1814 = vunpack.c.l.b16 %v1764
        %v1815 = vunpack.c.l.b16 %v1767
        %v1816 = vunpack.c.l.b16 %v1771
        %v1817 = vunpack.c.l.b16 %v1774
        %v1818 = vunpack.c.l.b16 %v1778
        %v1819 = vunpack.c.l.b16 %v1781
        %v1820 = vunpack.c.l.b16 %v1785
        %v1821 = vunpack.c.l.b16 %v1788
        %v1822 = vunpack.c.l.b16 %v1792
        %v1823 = vunpack.c.l.b16 %v1795
        %v1824 = vunpack.c.l.b16 %v1799
        %v1825 = vunpack.c.l.b16 %v1802
        %v1826 = vunpack.c.l.b16 %v1806
        %v1827 = vunpack.c.l.b16 %v1809
        %v1828 = vpack.c.b16 %v1813, %v1812
        %v1829 = vpack.c.b16 %v1815, %v1814
        %v1830 = vpack.c.b16 %v1817, %v1816
        %v1831 = vpack.c.b16 %v1819, %v1818
        %v1832 = vpack.c.b16 %v1821, %v1820
        %v1833 = vpack.c.b16 %v1823, %v1822
        %v1834 = vpack.c.b16 %v1825, %v1824
        %v1835 = vpack.c.b16 %v1827, %v1826
        %v1837 = vsel %vm218, %v1828, 0
        %v1840 = vsel %vm218, %v1829, 0
        %v1843 = vsel %vm218, %v1830, 0
        %v1846 = vsel %vm218, %v1831, 0
        %v1849 = vsel %vm218, %v1832, 0
        %v1852 = vsel %vm218, %v1833, 0
        %v1855 = vsel %vm218, %v1834, 0
        %v1858 = vsel %vm218, %v1835, 0
        %v1861 = vsel %vm243, %v1811, 0
        %1863 = vmatpush.bf16.msra.mxu0 0
        %1864 = vmatpush.bf16.msra.mxu0 0
        %1865 = vmatpush.bf16.msra.mxu0 0
        %1866 = vmatpush.bf16.msra.mxu0 0
        %1867 = vmatpush.bf16.msra.mxu0 0
        %1868 = vmatpush.bf16.msra.mxu0 0
        %1869 = vmatpush.bf16.msra.mxu0 0
        %1870 = vmatpush.bf16.msra.mxu0 %v1861
        %1871 = vmatmul.bf16.gmra.mxu0 %v1837
        %v1872 = vpop.f32.mrf.mxu0
        %v1873 = vadd.f32 0.0, %v1872
        %v1874 = vpop.f32.mrf.mxu0
        %v1875 = vadd.f32 0.0, %v1874
        %1876 = vmatmul.bf16.gmra.mxu0 %v1840
        %v1877 = vpop.f32.mrf.mxu0
        %v1878 = vadd.f32 0.0, %v1877
        %v1879 = vpop.f32.mrf.mxu0
        %v1880 = vadd.f32 0.0, %v1879
        %1881 = vmatmul.bf16.gmra.mxu0 %v1843
        %v1882 = vpop.f32.mrf.mxu0
        %v1883 = vadd.f32 0.0, %v1882
        %v1884 = vpop.f32.mrf.mxu0
        %v1885 = vadd.f32 0.0, %v1884
        %1886 = vmatmul.bf16.gmra.mxu0 %v1846
        %v1887 = vpop.f32.mrf.mxu0
        %v1888 = vadd.f32 0.0, %v1887
        %v1889 = vpop.f32.mrf.mxu0
        %v1890 = vadd.f32 0.0, %v1889
        %1891 = vmatmul.bf16.gmra.mxu0 %v1849
        %v1892 = vpop.f32.mrf.mxu0
        %v1893 = vadd.f32 0.0, %v1892
        %v1894 = vpop.f32.mrf.mxu0
        %v1895 = vadd.f32 0.0, %v1894
        %1896 = vmatmul.bf16.gmra.mxu0 %v1852
        %v1897 = vpop.f32.mrf.mxu0
        %v1898 = vadd.f32 0.0, %v1897
        %v1899 = vpop.f32.mrf.mxu0
        %v1900 = vadd.f32 0.0, %v1899
        %1901 = vmatmul.bf16.gmra.mxu0 %v1855
        %v1902 = vpop.f32.mrf.mxu0
        %v1903 = vadd.f32 0.0, %v1902
        %v1904 = vpop.f32.mrf.mxu0
        %v1905 = vadd.f32 0.0, %v1904
        %1906 = vmatmul.bf16.gmra.mxu0 %v1858
        %v1907 = vpop.f32.mrf.mxu0
        %v1908 = vadd.f32 0.0, %v1907
        %v1909 = vpop.f32.mrf.mxu0
        %v1910 = vadd.f32 0.0, %v1909
        %1911 = vdwg.mxu0
        %v1912 = vld [vmem:[#allocation2] sm:$0xff]
        %v1913 = vld [vmem:[#allocation2 + $0x8] sm:$0xff]
        %v1914 = vld [vmem:[#allocation2 + $0x10] sm:$0xff]
        %v1915 = vld [vmem:[#allocation2 + $0x18] sm:$0xff]
        %v1916 = vld [vmem:[#allocation2 + $0x20] sm:$0xff]
        %v1917 = vld [vmem:[#allocation2 + $0x28] sm:$0xff]
        %v1918 = vld [vmem:[#allocation2 + $0x30] sm:$0xff]
        %v1919 = vld [vmem:[#allocation2 + $0x38] sm:$0xff]
        %v1920 = vld [vmem:[#allocation2 + $0x40] sm:$0xff]
        %v1921 = vld [vmem:[#allocation2 + $0x48] sm:$0xff]
        %v1922 = vld [vmem:[#allocation2 + $0x50] sm:$0xff]
        %v1923 = vld [vmem:[#allocation2 + $0x58] sm:$0xff]
        %v1924 = vld [vmem:[#allocation2 + $0x60] sm:$0xff]
        %v1925 = vld [vmem:[#allocation2 + $0x68] sm:$0xff]
        %v1926 = vld [vmem:[#allocation2 + $0x70] sm:$0xff]
        %v1927 = vld [vmem:[#allocation2 + $0x78] sm:$0xff]
        %v1928 = vadd.f32 %v1912, %v1873
        %v1929 = vadd.f32 %v1913, %v1875
        %v1930 = vadd.f32 %v1914, %v1878
        %v1931 = vadd.f32 %v1915, %v1880
        %v1932 = vadd.f32 %v1916, %v1883
        %v1933 = vadd.f32 %v1917, %v1885
        %v1934 = vadd.f32 %v1918, %v1888
        %v1935 = vadd.f32 %v1919, %v1890
        %v1936 = vadd.f32 %v1920, %v1893
        %v1937 = vadd.f32 %v1921, %v1895
        %v1938 = vadd.f32 %v1922, %v1898
        %v1939 = vadd.f32 %v1923, %v1900
        %v1940 = vadd.f32 %v1924, %v1903
        %v1941 = vadd.f32 %v1925, %v1905
        %v1942 = vadd.f32 %v1926, %v1908
        %v1943 = vadd.f32 %v1927, %v1910
        %1944 = vst [vmem:[#allocation2] sm:$0xff] %v1928
        %1945 = vst [vmem:[#allocation2 + $0x8] sm:$0xff] %v1929
        %1946 = vst [vmem:[#allocation2 + $0x10] sm:$0xff] %v1930
        %1947 = vst [vmem:[#allocation2 + $0x18] sm:$0xff] %v1931
        %1948 = vst [vmem:[#allocation2 + $0x20] sm:$0xff] %v1932
        %1949 = vst [vmem:[#allocation2 + $0x28] sm:$0xff] %v1933
        %1950 = vst [vmem:[#allocation2 + $0x30] sm:$0xff] %v1934
        %1951 = vst [vmem:[#allocation2 + $0x38] sm:$0xff] %v1935
        %1952 = vst [vmem:[#allocation2 + $0x40] sm:$0xff] %v1936
        %1953 = vst [vmem:[#allocation2 + $0x48] sm:$0xff] %v1937
        %1954 = vst [vmem:[#allocation2 + $0x50] sm:$0xff] %v1938
        %1955 = vst [vmem:[#allocation2 + $0x58] sm:$0xff] %v1939
        %1956 = vst [vmem:[#allocation2 + $0x60] sm:$0xff] %v1940
        %1957 = vst [vmem:[#allocation2 + $0x68] sm:$0xff] %v1941
        %1958 = vst [vmem:[#allocation2 + $0x70] sm:$0xff] %v1942
        %1959 = vst [vmem:[#allocation2 + $0x78] sm:$0xff] %v1943
        %v1960 = vld [vmem:[%s1523] sm:$0xc]
        %v1961 = vld [vmem:[%s1523 + $0x4] sm:$0xf]
        %v1962 = vld [vmem:[%s1523 + $0x8] sm:$0x3]
        %v1963 = vld [vmem:[%s1523 + $0xc] sm:$0xc]
        %v1964 = vld [vmem:[%s1523 + $0x10] sm:$0xf]
        %v1965 = vld [vmem:[%s1523 + $0x14] sm:$0x3]
        %v1966 = vld [vmem:[%s1523 + $0x18] sm:$0xc]
        %v1967 = vld [vmem:[%s1523 + $0x1c] sm:$0xf]
        %v1968 = vld [vmem:[%s1523 + $0x20] sm:$0x3]
        %v1969 = vld [vmem:[%s1523 + $0x24] sm:$0xc]
        %v1970 = vld [vmem:[%s1523 + $0x28] sm:$0xf]
        %v1971 = vld [vmem:[%s1523 + $0x2c] sm:$0x3]
        %v1972 = vld [vmem:[%s1523 + $0x30] sm:$0xc]
        %v1973 = vld [vmem:[%s1523 + $0x34] sm:$0xf]
        %v1974 = vld [vmem:[%s1523 + $0x38] sm:$0x3]
        %v1975 = vld [vmem:[%s1523 + $0x3c] sm:$0xc]
        %v1976 = vld [vmem:[%s1523 + $0x40] sm:$0xf]
        %v1977 = vld [vmem:[%s1523 + $0x44] sm:$0x3]
        %v1978 = vld [vmem:[%s1523 + $0x48] sm:$0xc]
        %v1979 = vld [vmem:[%s1523 + $0x4c] sm:$0xf]
        %v1980 = vld [vmem:[%s1523 + $0x50] sm:$0x3]
        %v1981 = vld [vmem:[%s1523 + $0x54] sm:$0xc]
        %v1982 = vld [vmem:[%s1523 + $0x58] sm:$0xf]
        %v1983 = vld [vmem:[%s1523 + $0x5c] sm:$0x3]
        %v2008 = vrot.slane %v1960, 6
        %v2009 = vrot.slane %v2008, 4
        %v2010 = vrot.slane %v1961, 6
        %v2011 = vsel %vm619, %v2009, %v2010
        %v2012 = vrot.slane %v2010, 4
        %v2013 = vrot.slane %v1962, 6
        %v2014 = vsel %vm619, %v2012, %v2013
        %v2015 = vrot.slane %v1963, 6
        %v2016 = vrot.slane %v2015, 4
        %v2017 = vrot.slane %v1964, 6
        %v2018 = vsel %vm619, %v2016, %v2017
        %v2019 = vrot.slane %v2017, 4
        %v2020 = vrot.slane %v1965, 6
        %v2021 = vsel %vm619, %v2019, %v2020
        %v2022 = vrot.slane %v1966, 6
        %v2023 = vrot.slane %v2022, 4
        %v2024 = vrot.slane %v1967, 6
        %v2025 = vsel %vm619, %v2023, %v2024
        %v2026 = vrot.slane %v2024, 4
        %v2027 = vrot.slane %v1968, 6
        %v2028 = vsel %vm619, %v2026, %v2027
        %v2029 = vrot.slane %v1969, 6
        %v2030 = vrot.slane %v2029, 4
        %v2031 = vrot.slane %v1970, 6
        %v2032 = vsel %vm619, %v2030, %v2031
        %v2033 = vrot.slane %v2031, 4
        %v2034 = vrot.slane %v1971, 6
        %v2035 = vsel %vm619, %v2033, %v2034
        %v2036 = vrot.slane %v1972, 6
        %v2037 = vrot.slane %v2036, 4
        %v2038 = vrot.slane %v1973, 6
        %v2039 = vsel %vm619, %v2037, %v2038
        %v2040 = vrot.slane %v2038, 4
        %v2041 = vrot.slane %v1974, 6
        %v2042 = vsel %vm619, %v2040, %v2041
        %v2043 = vrot.slane %v1975, 6
        %v2044 = vrot.slane %v2043, 4
        %v2045 = vrot.slane %v1976, 6
        %v2046 = vsel %vm619, %v2044, %v2045
        %v2047 = vrot.slane %v2045, 4
        %v2048 = vrot.slane %v1977, 6
        %v2049 = vsel %vm619, %v2047, %v2048
        %v2050 = vrot.slane %v1978, 6
        %v2051 = vrot.slane %v2050, 4
        %v2052 = vrot.slane %v1979, 6
        %v2053 = vsel %vm619, %v2051, %v2052
        %v2054 = vrot.slane %v2052, 4
        %v2055 = vrot.slane %v1980, 6
        %v2056 = vsel %vm619, %v2054, %v2055
        %v2057 = vrot.slane %v1981, 6
        %v2058 = vrot.slane %v2057, 4
        %v2059 = vrot.slane %v1982, 6
        %v2060 = vsel %vm619, %v2058, %v2059
        %v2061 = vrot.slane %v2059, 4
        %v2062 = vrot.slane %v1983, 6
        %v2063 = vsel %vm619, %v2061, %v2062
        %s2064 = scalar_lea.vmem %s1, 16
        %v2065 = vld [vmem:[%s2064] sm:$0x3]
        %v2066 = vunpack.c.l.b16 %v2011
        %v2067 = vunpack.c.l.b16 %v2014
        %v2068 = vunpack.c.l.b16 %v2018
        %v2069 = vunpack.c.l.b16 %v2021
        %v2070 = vunpack.c.l.b16 %v2025
        %v2071 = vunpack.c.l.b16 %v2028
        %v2072 = vunpack.c.l.b16 %v2032
        %v2073 = vunpack.c.l.b16 %v2035
        %v2074 = vunpack.c.l.b16 %v2039
        %v2075 = vunpack.c.l.b16 %v2042
        %v2076 = vunpack.c.l.b16 %v2046
        %v2077 = vunpack.c.l.b16 %v2049
        %v2078 = vunpack.c.l.b16 %v2053
        %v2079 = vunpack.c.l.b16 %v2056
        %v2080 = vunpack.c.l.b16 %v2060
        %v2081 = vunpack.c.l.b16 %v2063
        %v2082 = vpack.c.b16 %v2067, %v2066
        %v2083 = vpack.c.b16 %v2069, %v2068
        %v2084 = vpack.c.b16 %v2071, %v2070
        %v2085 = vpack.c.b16 %v2073, %v2072
        %v2086 = vpack.c.b16 %v2075, %v2074
        %v2087 = vpack.c.b16 %v2077, %v2076
        %v2088 = vpack.c.b16 %v2079, %v2078
        %v2089 = vpack.c.b16 %v2081, %v2080
        %v2091 = vsel %vm218, %v2082, 0
        %v2094 = vsel %vm218, %v2083, 0
        %v2097 = vsel %vm218, %v2084, 0
        %v2100 = vsel %vm218, %v2085, 0
        %v2103 = vsel %vm218, %v2086, 0
        %v2106 = vsel %vm218, %v2087, 0
        %v2109 = vsel %vm218, %v2088, 0
        %v2112 = vsel %vm218, %v2089, 0
        %v2115 = vsel %vm243, %v2065, 0
        %2117 = vmatpush.bf16.msra.mxu0 0
        %2118 = vmatpush.bf16.msra.mxu0 0
        %2119 = vmatpush.bf16.msra.mxu0 0
        %2120 = vmatpush.bf16.msra.mxu0 0
        %2121 = vmatpush.bf16.msra.mxu0 0
        %2122 = vmatpush.bf16.msra.mxu0 0
        %2123 = vmatpush.bf16.msra.mxu0 0
        %2124 = vmatpush.bf16.msra.mxu0 %v2115
        %2125 = vmatmul.bf16.gmra.mxu0 %v2091
        %v2126 = vpop.f32.mrf.mxu0
        %v2127 = vadd.f32 0.0, %v2126
        %v2128 = vpop.f32.mrf.mxu0
        %v2129 = vadd.f32 0.0, %v2128
        %2130 = vmatmul.bf16.gmra.mxu0 %v2094
        %v2131 = vpop.f32.mrf.mxu0
        %v2132 = vadd.f32 0.0, %v2131
        %v2133 = vpop.f32.mrf.mxu0
        %v2134 = vadd.f32 0.0, %v2133
        %2135 = vmatmul.bf16.gmra.mxu0 %v2097
        %v2136 = vpop.f32.mrf.mxu0
        %v2137 = vadd.f32 0.0, %v2136
        %v2138 = vpop.f32.mrf.mxu0
        %v2139 = vadd.f32 0.0, %v2138
        %2140 = vmatmul.bf16.gmra.mxu0 %v2100
        %v2141 = vpop.f32.mrf.mxu0
        %v2142 = vadd.f32 0.0, %v2141
        %v2143 = vpop.f32.mrf.mxu0
        %v2144 = vadd.f32 0.0, %v2143
        %2145 = vmatmul.bf16.gmra.mxu0 %v2103
        %v2146 = vpop.f32.mrf.mxu0
        %v2147 = vadd.f32 0.0, %v2146
        %v2148 = vpop.f32.mrf.mxu0
        %v2149 = vadd.f32 0.0, %v2148
        %2150 = vmatmul.bf16.gmra.mxu0 %v2106
        %v2151 = vpop.f32.mrf.mxu0
        %v2152 = vadd.f32 0.0, %v2151
        %v2153 = vpop.f32.mrf.mxu0
        %v2154 = vadd.f32 0.0, %v2153
        %2155 = vmatmul.bf16.gmra.mxu0 %v2109
        %v2156 = vpop.f32.mrf.mxu0
        %v2157 = vadd.f32 0.0, %v2156
        %v2158 = vpop.f32.mrf.mxu0
        %v2159 = vadd.f32 0.0, %v2158
        %2160 = vmatmul.bf16.gmra.mxu0 %v2112
        %v2161 = vpop.f32.mrf.mxu0
        %v2162 = vadd.f32 0.0, %v2161
        %v2163 = vpop.f32.mrf.mxu0
        %v2164 = vadd.f32 0.0, %v2163
        %2165 = vdwg.mxu0
        %v2166 = vld [vmem:[#allocation2] sm:$0xff]
        %v2167 = vld [vmem:[#allocation2 + $0x8] sm:$0xff]
        %v2168 = vld [vmem:[#allocation2 + $0x10] sm:$0xff]
        %v2169 = vld [vmem:[#allocation2 + $0x18] sm:$0xff]
        %v2170 = vld [vmem:[#allocation2 + $0x20] sm:$0xff]
        %v2171 = vld [vmem:[#allocation2 + $0x28] sm:$0xff]
        %v2172 = vld [vmem:[#allocation2 + $0x30] sm:$0xff]
        %v2173 = vld [vmem:[#allocation2 + $0x38] sm:$0xff]
        %v2174 = vld [vmem:[#allocation2 + $0x40] sm:$0xff]
        %v2175 = vld [vmem:[#allocation2 + $0x48] sm:$0xff]
        %v2176 = vld [vmem:[#allocation2 + $0x50] sm:$0xff]
        %v2177 = vld [vmem:[#allocation2 + $0x58] sm:$0xff]
        %v2178 = vld [vmem:[#allocation2 + $0x60] sm:$0xff]
        %v2179 = vld [vmem:[#allocation2 + $0x68] sm:$0xff]
        %v2180 = vld [vmem:[#allocation2 + $0x70] sm:$0xff]
        %v2181 = vld [vmem:[#allocation2 + $0x78] sm:$0xff]
        %v2182 = vadd.f32 %v2166, %v2127
        %v2183 = vadd.f32 %v2167, %v2129
        %v2184 = vadd.f32 %v2168, %v2132
        %v2185 = vadd.f32 %v2169, %v2134
        %v2186 = vadd.f32 %v2170, %v2137
        %v2187 = vadd.f32 %v2171, %v2139
        %v2188 = vadd.f32 %v2172, %v2142
        %v2189 = vadd.f32 %v2173, %v2144
        %v2190 = vadd.f32 %v2174, %v2147
        %v2191 = vadd.f32 %v2175, %v2149
        %v2192 = vadd.f32 %v2176, %v2152
        %v2193 = vadd.f32 %v2177, %v2154
        %v2194 = vadd.f32 %v2178, %v2157
        %v2195 = vadd.f32 %v2179, %v2159
        %v2196 = vadd.f32 %v2180, %v2162
        %v2197 = vadd.f32 %v2181, %v2164
        %2198 = vst [vmem:[#allocation2] sm:$0xff] %v2182
        %2199 = vst [vmem:[#allocation2 + $0x8] sm:$0xff] %v2183
        %2200 = vst [vmem:[#allocation2 + $0x10] sm:$0xff] %v2184
        %2201 = vst [vmem:[#allocation2 + $0x18] sm:$0xff] %v2185
        %2202 = vst [vmem:[#allocation2 + $0x20] sm:$0xff] %v2186
        %2203 = vst [vmem:[#allocation2 + $0x28] sm:$0xff] %v2187
        %2204 = vst [vmem:[#allocation2 + $0x30] sm:$0xff] %v2188
        %2205 = vst [vmem:[#allocation2 + $0x38] sm:$0xff] %v2189
        %2206 = vst [vmem:[#allocation2 + $0x40] sm:$0xff] %v2190
        %2207 = vst [vmem:[#allocation2 + $0x48] sm:$0xff] %v2191
        %2208 = vst [vmem:[#allocation2 + $0x50] sm:$0xff] %v2192
        %2209 = vst [vmem:[#allocation2 + $0x58] sm:$0xff] %v2193
        %2210 = vst [vmem:[#allocation2 + $0x60] sm:$0xff] %v2194
        %2211 = vst [vmem:[#allocation2 + $0x68] sm:$0xff] %v2195
        %2212 = vst [vmem:[#allocation2 + $0x70] sm:$0xff] %v2196
        %2213 = vst [vmem:[#allocation2 + $0x78] sm:$0xff] %v2197
        %v2214 = vld [vmem:[#allocation2] sm:$0xff]
        %v2215 = vld [vmem:[#allocation2 + $0x8] sm:$0xff]
        %v2216 = vld [vmem:[#allocation2 + $0x10] sm:$0xff]
        %v2217 = vld [vmem:[#allocation2 + $0x18] sm:$0xff]
        %v2218 = vld [vmem:[#allocation2 + $0x20] sm:$0xff]
        %v2219 = vld [vmem:[#allocation2 + $0x28] sm:$0xff]
        %v2220 = vld [vmem:[#allocation2 + $0x30] sm:$0xff]
        %v2221 = vld [vmem:[#allocation2 + $0x38] sm:$0xff]
        %v2222 = vld [vmem:[#allocation2 + $0x40] sm:$0xff]
        %v2223 = vld [vmem:[#allocation2 + $0x48] sm:$0xff]
        %v2224 = vld [vmem:[#allocation2 + $0x50] sm:$0xff]
        %v2225 = vld [vmem:[#allocation2 + $0x58] sm:$0xff]
        %v2226 = vld [vmem:[#allocation2 + $0x60] sm:$0xff]
        %v2227 = vld [vmem:[#allocation2 + $0x68] sm:$0xff]
        %v2228 = vld [vmem:[#allocation2 + $0x70] sm:$0xff]
        %v2229 = vld [vmem:[#allocation2 + $0x78] sm:$0xff]
        %v2230 = vadd.f32 %v2214, %v2215
        %v2231 = vadd.f32 %v2230, %v2216
        %v2232 = vadd.f32 %v2231, %v2217
        %v2233 = vadd.f32 %v2232, %v2218
        %v2234 = vadd.f32 %v2233, %v2219
        %v2235 = vadd.f32 %v2234, %v2220
        %v2236 = vadd.f32 %v2235, %v2221
        %v2237 = vadd.f32 %v2236, %v2222
        %v2238 = vadd.f32 %v2237, %v2223
        %v2239 = vadd.f32 %v2238, %v2224
        %v2240 = vadd.f32 %v2239, %v2225
        %v2241 = vadd.f32 %v2240, %v2226
        %v2242 = vadd.f32 %v2241, %v2227
        %v2243 = vadd.f32 %v2242, %v2228
        %v2244 = vadd.f32 %v2243, %v2229
        %v2245 = vrot.slane %v2244, 4
        %v2246 = vadd.f32 %v2244, %v2245
        %v2247 = vrot.slane %v2246, 2
        %v2248 = vadd.f32 %v2246, %v2247
        %v2249 = vrot.slane %v2248, 1
        %v2250 = vadd.f32 %v2248, %v2249
        %v2251 = vmul.f32 %v2214, %v2214
        %v2252 = vmul.f32 %v2215, %v2215
        %v2253 = vmul.f32 %v2216, %v2216
        %v2254 = vmul.f32 %v2217, %v2217
        %v2255 = vmul.f32 %v2218, %v2218
        %v2256 = vmul.f32 %v2219, %v2219
        %v2257 = vmul.f32 %v2220, %v2220
        %v2258 = vmul.f32 %v2221, %v2221
        %v2259 = vmul.f32 %v2222, %v2222
        %v2260 = vmul.f32 %v2223, %v2223
        %v2261 = vmul.f32 %v2224, %v2224
        %v2262 = vmul.f32 %v2225, %v2225
        %v2263 = vmul.f32 %v2226, %v2226
        %v2264 = vmul.f32 %v2227, %v2227
        %v2265 = vmul.f32 %v2228, %v2228
        %v2266 = vmul.f32 %v2229, %v2229
        %v2267 = vadd.f32 %v2251, %v2252
        %v2268 = vadd.f32 %v2267, %v2253
        %v2269 = vadd.f32 %v2268, %v2254
        %v2270 = vadd.f32 %v2269, %v2255
        %v2271 = vadd.f32 %v2270, %v2256
        %v2272 = vadd.f32 %v2271, %v2257
        %v2273 = vadd.f32 %v2272, %v2258
        %v2274 = vadd.f32 %v2273, %v2259
        %v2275 = vadd.f32 %v2274, %v2260
        %v2276 = vadd.f32 %v2275, %v2261
        %v2277 = vadd.f32 %v2276, %v2262
        %v2278 = vadd.f32 %v2277, %v2263
        %v2279 = vadd.f32 %v2278, %v2264
        %v2280 = vadd.f32 %v2279, %v2265
        %v2281 = vadd.f32 %v2280, %v2266
        %v2282 = vrot.slane %v2281, 4
        %v2283 = vadd.f32 %v2281, %v2282
        %v2284 = vrot.slane %v2283, 2
        %v2285 = vadd.f32 %v2283, %v2284
        %v2286 = vrot.slane %v2285, 1
        %v2287 = vadd.f32 %v2285, %v2286
        %vm2288 = vcmask 1040384
        %v2289 = vsel %vm2288, %v2250, %v2287
        %2290 = vst [vmem:[%s150] sm:$0x3] %v2289
        %s2291 = sand.u32 %s85, 1
        %s2292 = scalar_lea.sflag [#allocation4], %s2291
        %s2293 = sand.u32 %s85, 1
        %s2294 = smul.addr %s2293, 2
        %s2295 = scalar_lea.vmem [#allocation3], %s2294
        // Predicated region
        $region29: #{tpu_custom_call.1} parent=27 // pred_check
          %p2296 = pneg %p95
        $region30: #{tpu_custom_call.1} parent=27 // pred_check_branch
          %2298 = sbr.rel (%p2296) target = $region32
        $region31: #{tpu_custom_call.1} parent=27 // pred_region
          %2300 = vsyncadd %s2292, 0
          %s2301 = smul.addr %s20, 2
          %s2302 = sadd.s32 %s21, %s2301
          %s2303 = smul.addr %s2302, 2
          %s2304 = scalar_lea.hbm %s2, %s2303
          %s2306 = sshll.u32 %s2295, 4
          %s2307 = int_to_ptr.vmem [resolvable:$true] %s2306
          %s2308 = sshll.u32 %s2304, 4
          %s2309 = int_to_ptr.hbm [resolvable:$true] %s2308
          %2311 = dma.vmem_to_hbm [thread:$0]  %s2307, 32, %s2309, %s2292
        $region32: #{tpu_custom_call.1} parent=27 // pred_fallthru
          _
      $region28: #{tpu_custom_call.1} parent=5 // pred_fallthru
        _
      %p2312 = scmp.le.s32.totalorder 2, %s11
      // Predicated region
      $region33: #{tpu_custom_call.1} parent=5 // pred_check
        %p2313 = pneg %p2312
      $region34: #{tpu_custom_call.1} parent=5 // pred_check_branch
        %2315 = sbr.rel (%p2313) target = $region36
      $region35: #{tpu_custom_call.1} parent=5 // pred_region
        %s2316 = ssub.s32 %s11, 2
        // Predicated region
        $region37: #{tpu_custom_call.1} parent=35 // pred_check
          %p2317 = pneg %p101
        $region38: #{tpu_custom_call.1} parent=35 // pred_check_branch
          %2319 = sbr.rel (%p2317) target = $region40
        $region39: #{tpu_custom_call.1} parent=35 // pred_region
          %s2320 = sand.u32 %s86, 1
          %s2321 = scalar_lea.sflag [#allocation4], %s2320
          %s2322 = sand.u32 %s86, 1
          %s2323 = smul.addr %s2322, 2
          %s2324 = scalar_lea.vmem [#allocation3], %s2323
          %2326 = dma.done %s2321, 32
        $region40: #{tpu_custom_call.1} parent=35 // pred_fallthru
          _
      $region36: #{tpu_custom_call.1} parent=5 // pred_fallthru
        _
    $region6: #{tpu_custom_call.1} parent=1 // loop_footer
      %s15 = sadd.s32 1, %s11
    $region7: #{tpu_custom_call.1} parent=1 // loop_footer_branch
      %10 = sbr.rel target = $region3
    $region8: #{tpu_custom_call.1} parent=1 // loop_exit
      _
    %2327 = vsyncpa [#allocation4], 1
    %s2328 = scalar_lea.sflag [#allocation4], 1
    %2329 = vsyncpa %s2328, 1

</llo_original>
